<compile_context>
chip_gen: v6e
topology: v6e:2x2x1
jax: 0.10.0
libtpu: 0.0.40
codegen_flags: <defaults>
</compile_context>

<pallas_src>
import math

import jax
import jax.numpy as jnp
from jax.experimental import pallas as pl
from jax.experimental.pallas import tpu as pltpu


# ----------------------------------------------------------------------------
# Generation-aware VMEM budget and tile sizing
# ----------------------------------------------------------------------------
_VMEM_LIMIT_CACHE = None


def _vmem_limit():
    """Compiler VMEM limit: ~3/4 of physical VMEM, capped at 100 MiB."""
    global _VMEM_LIMIT_CACHE
    if _VMEM_LIMIT_CACHE is None:
        cap = None
        try:
            info = pltpu.get_tpu_info()
            for attr in ("vmem_capacity_bytes", "vmem_size_bytes", "vmem_bytes"):
                cap = getattr(info, attr, None)
                if cap:
                    break
        except Exception:
            cap = None
        if not cap:
            cap = 64 * 1024 * 1024  # conservative (v7x-sized) fallback
        _VMEM_LIMIT_CACHE = int(min((int(cap) * 3) // 4, 100 * 1024 * 1024))
    return _VMEM_LIMIT_CACHE


def _pick_row_tile(H, W, Cin, Cout, *, even, row_cap=None):
    """Largest divisor of H (even when a pool is fused) whose approximate
    per-step VMEM footprint fits the generation-dependent budget."""
    budget = _vmem_limit()
    # bytes per output row: input block (x2 buf) + column-shift copies +
    # [HW,3Cin] patches + f32 acc/epilogue + bf16 output (x2 buf).
    per_row = W * (18 * Cin + 14 * Cout)
    fixed = 2 * (9 * Cin * Cout * 2) + (2 << 20)   # double-buffered weights + slack
    cap = max((budget - fixed) // max(per_row, 1), 2 if even else 1)
    if row_cap is not None:
        cap = min(cap, row_cap)
    cap = int(min(cap, H))
    for d in range(cap, 0, -1):
        if H % d == 0 and (not even or d % 2 == 0):
            return d
    return H


# ----------------------------------------------------------------------------
# Lane-dense store capability probe (for Cout == 64 layers)
# ----------------------------------------------------------------------------
_LANE_DENSE_OK = False


def _probe_lane_dense():
    """Enable 128-wide stores for Cout=64 layers iff the Mosaic lowering
    supports the required (M, 64) -> (M//2, 128) value repack."""
    global _LANE_DENSE_OK
    try:
        def k(x_ref, o_ref):
            o_ref[...] = x_ref[...].reshape(128, 128)

        x = (jnp.arange(256 * 64, dtype=jnp.float32)
             .astype(jnp.bfloat16).reshape(256, 64))
        y = pl.pallas_call(
            k, out_shape=jax.ShapeDtypeStruct((128, 128), jnp.bfloat16))(x)
        _LANE_DENSE_OK = bool(jnp.array_equal(y.reshape(256, 64), x))
    except Exception:
        _LANE_DENSE_OK = False


# ----------------------------------------------------------------------------
# Conv 3x3, stride 1, pad 1, + bias + ReLU (+ optional fused 2x2 maxpool)
# General path (Cin >= 64). Grid: (batch, row-tile), both "parallel".
# ----------------------------------------------------------------------------
def _make_conv_kernel(Th, W, Cin, Cout, fuse_pool, lane_out, lane_pool):
    HW = Th * W

    def kernel(a_ref, b1_ref, b2_ref, w_ref, bias_ref, *out_refs):
        o_ref = out_refs[0]
        a = a_ref[0]                                             # (Th, Wp, Cin)
        halo = jnp.concatenate([b1_ref[0], b2_ref[0]], axis=0)   # (2, Wp, Cin)

        # Three dx column shifts, hoisted & row-flattened once.
        cols_a = [a[:, dx:dx + W, :].reshape(HW, Cin) for dx in range(3)]
        cols_h = [halo[:, dx:dx + W, :].reshape(2 * W, Cin) for dx in range(3)]
        patch_a = jnp.concatenate(cols_a, axis=-1)               # (HW,   3*Cin)
        patch_h = jnp.concatenate(cols_h, axis=-1)               # (2*W,  3*Cin)

        # dy-grouped K = 3*Cin MXU matmuls (3 instead of 9 shallow ones).
        acc = jnp.dot(patch_a, w_ref[0], preferred_element_type=jnp.float32)
        for dy in (1, 2):
            patch = jnp.concatenate([patch_a[dy * W:], patch_h[:dy * W]], axis=0)
            acc = acc + jnp.dot(patch, w_ref[dy],
                                preferred_element_type=jnp.float32)

        out = jnp.maximum(acc + bias_ref[...], 0.0)              # (HW, Cout) f32
        out_c = out.astype(o_ref.dtype)
        if lane_out:
            o_ref[0, 0] = out_c.reshape(HW // 2, 128)
        else:
            o_ref[0, 0] = out_c

        if fuse_pool:
            p_ref = out_refs[1]
            HWq = (Th // 2) * (W // 2)
            v = out.reshape(Th // 2, 2, W, Cout).max(axis=1)
            v = v.reshape(Th // 2, W // 2, 2, Cout).max(axis=2)
            v = v.reshape(HWq, Cout).astype(p_ref.dtype)
            if lane_pool:
                p_ref[0, 0] = v.reshape(HWq // 2, 128)
            else:
                p_ref[0, 0] = v

    return kernel


def _conv3x3_relu_general(x, w, b, *, fuse_pool=False, row_cap=None):
    N, H, W, Cin = x.shape
    Cout = w.shape[-1]
    if fuse_pool:
        assert H % 2 == 0 and W % 2 == 0, "fused 2x2 pool needs even H, W"

    Th = _pick_row_tile(H, W, Cin, Cout, even=fuse_pool, row_cap=row_cap)
    nT = H // Th
    HW = Th * W
    Wp = W + 2

    # TODO(synk): fold this zero-pad into the previous layer's output store.
    xp = jnp.pad(x, ((0, 0), (1, 1), (1, 1), (0, 0)))            # (N, H+2, W+2, Cin)
    w3 = w.reshape(3, 3 * Cin, Cout).astype(jnp.bfloat16)
    b2 = b.reshape(1, Cout).astype(jnp.float32)

    lane_out = _LANE_DENSE_OK and Cout == 64 and HW % 2 == 0
    if lane_out:
        out_shape0 = jax.ShapeDtypeStruct((N, nT, HW // 2, 128), x.dtype)
        out_spec0 = pl.BlockSpec((1, 1, HW // 2, 128), lambda n, t: (n, t, 0, 0))
    else:
        out_shape0 = jax.ShapeDtypeStruct((N, nT, HW, Cout), x.dtype)
        out_spec0 = pl.BlockSpec((1, 1, HW, Cout), lambda n, t: (n, t, 0, 0))

    lane_pool = False
    if fuse_pool:
        HWq = (Th // 2) * (W // 2)
        lane_pool = _LANE_DENSE_OK and Cout == 64 and HWq % 2 == 0
        if lane_pool:
            pool_shape = jax.ShapeDtypeStruct((N, nT, HWq // 2, 128), x.dtype)
            pool_spec = pl.BlockSpec((1, 1, HWq // 2, 128),
                                     lambda n, t: (n, t, 0, 0))
        else:
            pool_shape = jax.ShapeDtypeStruct((N, nT, HWq, Cout), x.dtype)
            pool_spec = pl.BlockSpec((1, 1, HWq, Cout), lambda n, t: (n, t, 0, 0))
        out_shape = (out_shape0, pool_shape)
        out_specs = [out_spec0, pool_spec]
    else:
        out_shape = out_shape0
        out_specs = out_spec0

    in_specs = [
        # Th-row interior tile (no halo duplication in HBM).
        pl.BlockSpec((1, Th, Wp, Cin), lambda n, t: (n, t, 0, 0)),
        # Two 1-row bottom-halo blocks (element-sized H blocks -> any offset).
        pl.BlockSpec((1, 1, Wp, Cin), lambda n, t: (n, t * Th + Th, 0, 0)),
        pl.BlockSpec((1, 1, Wp, Cin), lambda n, t: (n, t * Th + Th + 1, 0, 0)),
        # Weights / bias: constant block index -> DMA'd once, kept resident.
        pl.BlockSpec((3, 3 * Cin, Cout), lambda n, t: (0, 0, 0)),
        pl.BlockSpec((1, Cout), lambda n, t: (0, 0)),
    ]

    res = pl.pallas_call(
        _make_conv_kernel(Th, W, Cin, Cout, fuse_pool, lane_out, lane_pool),
        out_shape=out_shape,
        grid_spec=pltpu.PrefetchScalarGridSpec(
            num_scalar_prefetch=0,
            grid=(N, nT),
            in_specs=in_specs,
            out_specs=out_specs,
        ),
        compiler_params=pltpu.CompilerParams(
            dimension_semantics=("parallel", "parallel"),
            vmem_limit_bytes=_vmem_limit(),
        ),
    )(xp, xp, xp, w3, b2)

    if fuse_pool:
        act, pooled = res
        act = act.reshape(N, H, W, Cout)
        pooled = pooled.reshape(N, H // 2, W // 2, Cout)
        return act, pooled
    return res.reshape(N, H, W, Cout)


# ----------------------------------------------------------------------------
# First conv (Cin == 3): build the 27-wide patch once (cheap: 3 channels) and
# do a single [HW, 27] @ [27, 64] matmul per tile.
# ----------------------------------------------------------------------------
def _conv3x3_relu_im2col(x, w, b):
    N, H, W, Cin = x.shape
    Cout = w.shape[-1]
    K = 9 * Cin
    Th = _pick_row_tile(H, W, 9 * Cin, Cout, even=False)
    nT = H // Th
    HW = Th * W

    xp = jnp.pad(x, ((0, 0), (1, 1), (1, 1), (0, 0)))
    patches = jnp.stack(
        [xp[:, dy:dy + H, dx:dx + W, :] for dy in range(3) for dx in range(3)],
        axis=3,
    )                                                   # [N, H, W, 9, Cin]
    patches = patches.reshape(N, nT, HW, K)
    wk = w.reshape(K, Cout).astype(jnp.bfloat16)
    b2 = b.reshape(1, Cout).astype(jnp.float32)

    lane_out = _LANE_DENSE_OK and Cout == 64 and HW % 2 == 0

    def kernel(p_ref, w_ref, b_ref, o_ref):
        acc = jnp.dot(p_ref[0, 0], w_ref[...], preferred_element_type=jnp.float32)
        out = jnp.maximum(acc + b_ref[...], 0.0).astype(o_ref.dtype)
        if lane_out:
            o_ref[0, 0] = out.reshape(HW // 2, 128)
        else:
            o_ref[0, 0] = out

    if lane_out:
        out_shape = jax.ShapeDtypeStruct((N, nT, HW // 2, 128), x.dtype)
        out_spec = pl.BlockSpec((1, 1, HW // 2, 128), lambda n, t: (n, t, 0, 0))
    else:
        out_shape = jax.ShapeDtypeStruct((N, nT, HW, Cout), x.dtype)
        out_spec = pl.BlockSpec((1, 1, HW, Cout), lambda n, t: (n, t, 0, 0))

    out = pl.pallas_call(
        kernel,
        out_shape=out_shape,
        grid_spec=pltpu.PrefetchScalarGridSpec(
            num_scalar_prefetch=0,
            grid=(N, nT),
            in_specs=[
                pl.BlockSpec((1, 1, HW, K), lambda n, t: (n, t, 0, 0)),
                pl.BlockSpec((K, Cout), lambda n, t: (0, 0)),
                pl.BlockSpec((1, Cout), lambda n, t: (0, 0)),
            ],
            out_specs=out_spec,
        ),
        compiler_params=pltpu.CompilerParams(
            dimension_semantics=("parallel", "parallel"),
            vmem_limit_bytes=_vmem_limit(),
        ),
    )(patches, wk, b2)
    return out.reshape(N, H, W, Cout)


def conv3x3_relu(x_nhwc, w_hwio, b, *, fuse_pool=False):
    if x_nhwc.shape[-1] < 16:          # first VGG conv (Cin = 3)
        assert not fuse_pool
        return _conv3x3_relu_im2col(x_nhwc, w_hwio, b)
    return _conv3x3_relu_general(x_nhwc, w_hwio, b, fuse_pool=fuse_pool)


# ----------------------------------------------------------------------------
# VGG16 feature extractor: 5 stages, returns (out1, ..., out5)
# ----------------------------------------------------------------------------
_VGG16_CFG = [
    [(3, 64), (64, 64)],                        # layer1 = features[:4]
    [(64, 128), (128, 128)],                    # layer2 = features[4:9]
    [(128, 256), (256, 256), (256, 256)],       # layer3 = features[9:16]
    [(256, 512), (512, 512), (512, 512)],       # layer4 = features[16:23]
    [(512, 512), (512, 512), (512, 512)],       # layer5 = features[23:30]
]


def init_vgg16_params(key):
    """Deterministic He-style init; weights [3,3,Cin,Cout], bias zeros."""
    params = []
    for stage_cfg in _VGG16_CFG:
        stage = []
        for cin, cout in stage_cfg:
            key, sub = jax.random.split(key)
            std = math.sqrt(2.0 / (9.0 * cin))
            w = jax.random.normal(sub, (3, 3, cin, cout), jnp.float32) * std
            b = jnp.zeros((cout,), jnp.float32)
            stage.append((w, b))
        params.append(stage)
    return params


def vgg16_forward(x_nchw, params):
    """x_nchw: [N, 3, H, W] float32 -> tuple of 5 NCHW feature maps (float32)."""
    assert x_nchw.shape[2] % 16 == 0 and x_nchw.shape[3] % 16 == 0, (
        "this implementation requires H, W divisible by 16 (exact 2x2 pools)")
    h = jnp.transpose(x_nchw, (0, 2, 3, 1)).astype(jnp.bfloat16)  # NCHW -> NHWC
    outs = []
    n_stages = len(params)
    for si, stage in enumerate(params):
        pooled = None
        for li, (w, b) in enumerate(stage):
            last = li == len(stage) - 1
            fuse = last and si < n_stages - 1   # pool at the start of stages 2..5
            if fuse:
                h, pooled = conv3x3_relu(h, w, b, fuse_pool=True)
            else:
                h = conv3x3_relu(h, w, b)
        # Kept for PyTorch-layout fidelity; downstream style-transfer losses
        # could consume NHWC/bf16 directly and skip this HBM pass.
        outs.append(jnp.transpose(h, (0, 3, 1, 2)).astype(jnp.float32))
        if pooled is not None:
            h = pooled
    return tuple(outs)


if __name__ == "__main__":
    _probe_lane_dense()   # decide lane-dense store support before tracing

    key = jax.random.PRNGKey(0)
    pkey, xkey, ck1, ck2, ck3 = jax.random.split(key, 5)

    # --- self-check: row-tiled conv (multi-tile halo path + fused pool) -----
    cx = jax.random.normal(ck1, (1, 16, 16, 64), jnp.float32)
    cw = jax.random.normal(ck2, (3, 3, 64, 128), jnp.float32) * 0.05
    cb = jax.random.normal(ck3, (128,), jnp.float32) * 0.1
    cxb = cx.astype(jnp.bfloat16)
    act, pooled = _conv3x3_relu_general(cxb, cw, cb, fuse_pool=True, row_cap=8)
    ref = jax.lax.conv_general_dilated(
        cxb.astype(jnp.float32), cw.astype(jnp.bfloat16).astype(jnp.float32),
        (1, 1), "SAME", dimension_numbers=("NHWC", "HWIO", "NHWC"),
        precision=jax.lax.Precision.HIGHEST)
    ref = jnp.maximum(ref + cb, 0.0)
    ref_pool = jnp.max(ref.reshape(1, 8, 2, 8, 2, 128), axis=(2, 4))
    assert jnp.allclose(act.astype(jnp.float32), ref, atol=0.1, rtol=0.05), \
        "conv self-check failed"
    assert jnp.allclose(pooled.astype(jnp.float32), ref_pool, atol=0.1, rtol=0.05), \
        "fused-pool self-check failed"

    # --- full VGG16 feature extractor ---------------------------------------
    params = init_vgg16_params(pkey)
    # Small deterministic input: batch=2, 3 channels, 32x32 (divisible by 16 so
    # all four 2x2 pools are exact, as for real VGG inputs).
    x = jax.random.normal(xkey, (2, 3, 32, 32), jnp.float32)

    fwd = jax.jit(lambda inp: vgg16_forward(inp, params))
    out1, out2, out3, out4, out5 = fwd(x)
    jax.block_until_ready((out1, out2, out3, out4, out5))

    expected = [
        (2, 64, 32, 32),
        (2, 128, 16, 16),
        (2, 256, 8, 8),
        (2, 512, 4, 4),
        (2, 512, 2, 2),
    ]
    got = [tuple(o.shape) for o in (out1, out2, out3, out4, out5)]
    assert got == expected, got
    assert all(bool(jnp.isfinite(o).all()) for o in (out1, out2, out3, out4, out5))

    print("KERNEL_OK")
</pallas_src>

<mosaic_0001>
module attributes {stable_mosaic.version = 11 : i64} {
  func.func @k(%arg0: memref<256x64xbf16, #tpu.memory_space<vmem>>, %arg1: memref<128x128xbf16, #tpu.memory_space<vmem>>) attributes {dimension_semantics = [], scalar_prefetch = 0 : i64, scratch_operands = 0 : i64, tpu.core_type = #tpu.core_type<tc>} {
    %c0 = arith.constant 0 : index
    %c0_0 = arith.constant 0 : index
    %0 = vector.load %arg0[%c0, %c0_0] : memref<256x64xbf16, #tpu.memory_space<vmem>>, vector<256x64xbf16>
    %1 = vector.shape_cast %0 : vector<256x64xbf16> to vector<128x128xbf16>
    %c0_1 = arith.constant 0 : index
    %c0_2 = arith.constant 0 : index
    %2 = vector.load %arg1[%c0_1, %c0_2] : memref<128x128xbf16, #tpu.memory_space<vmem>>, vector<128x128xbf16>
    tpu.vector_store %arg1[%c0_1, %c0_2], %1 {strides = array<i32>} : memref<128x128xbf16, #tpu.memory_space<vmem>>, vector<128x128xbf16>,
    return
  }
}

module attributes {stable_mosaic.version = 11 : i64} {
  func.func @kernel(%arg0: i32, %arg1: i32, %arg2: memref<1x8x18x64xbf16, #tpu.memory_space<vmem>>, %arg3: memref<1x1x18x64xbf16, #tpu.memory_space<vmem>>, %arg4: memref<1x1x18x64xbf16, #tpu.memory_space<vmem>>, %arg5: memref<3x192x128xbf16, #tpu.memory_space<vmem>>, %arg6: memref<1x128xf32, #tpu.memory_space<vmem>>, %arg7: memref<1x1x128x128xbf16, #tpu.memory_space<vmem>>, %arg8: memref<1x1x32x128xbf16, #tpu.memory_space<vmem>>) attributes {dimension_semantics = [#tpu.dimension_semantics<parallel>, #tpu.dimension_semantics<parallel>], iteration_bounds = array<i64: 1, 2>, scalar_prefetch = 0 : i64, scratch_operands = 0 : i64, tpu.core_type = #tpu.core_type<tc>, window_params = [{transform_indices = @transform_0, window_bounds = array<i64: 1, 8, 18, 64>}, {transform_indices = @transform_1, window_bounds = array<i64: 1, 1, 18, 64>}, {transform_indices = @transform_2, window_bounds = array<i64: 1, 1, 18, 64>}, {pipeline_mode = #tpu.pipeline_mode<synchronous>, transform_indices = @transform_3, window_bounds = array<i64: 3, 192, 128>}, {pipeline_mode = #tpu.pipeline_mode<synchronous>, transform_indices = @transform_4, window_bounds = array<i64: 1, 128>}, {transform_indices = @transform_5, window_bounds = array<i64: 1, 1, 128, 128>}, {transform_indices = @transform_6, window_bounds = array<i64: 1, 1, 32, 128>}]} {
    %c0 = arith.constant 0 : index
    %c0_0 = arith.constant 0 : index
    %c0_1 = arith.constant 0 : index
    %c0_2 = arith.constant 0 : index
    %0 = vector.load %arg2[%c0, %c0_0, %c0_1, %c0_2] : memref<1x8x18x64xbf16, #tpu.memory_space<vmem>>, vector<1x8x18x64xbf16>
    %1 = vector.shape_cast %0 : vector<1x8x18x64xbf16> to vector<8x18x64xbf16>
    %c0_3 = arith.constant 0 : index
    %c0_4 = arith.constant 0 : index
    %c0_5 = arith.constant 0 : index
    %c0_6 = arith.constant 0 : index
    %2 = vector.load %arg3[%c0_3, %c0_4, %c0_5, %c0_6] : memref<1x1x18x64xbf16, #tpu.memory_space<vmem>>, vector<1x1x18x64xbf16>
    %3 = vector.shape_cast %2 : vector<1x1x18x64xbf16> to vector<1x18x64xbf16>
    %c0_7 = arith.constant 0 : index
    %c0_8 = arith.constant 0 : index
    %c0_9 = arith.constant 0 : index
    %c0_10 = arith.constant 0 : index
    %4 = vector.load %arg4[%c0_7, %c0_8, %c0_9, %c0_10] : memref<1x1x18x64xbf16, #tpu.memory_space<vmem>>, vector<1x1x18x64xbf16>
    %5 = vector.shape_cast %4 : vector<1x1x18x64xbf16> to vector<1x18x64xbf16>
    %6 = tpu.concatenate %3, %5 in 0 : vector<1x18x64xbf16>, vector<1x18x64xbf16> -> vector<2x18x64xbf16>
    %7 = vector.extract_strided_slice %1 {offsets = [0, 0, 0], sizes = [8, 16, 64], strides = [1, 1, 1]} : vector<8x18x64xbf16> to vector<8x16x64xbf16>
    %8 = vector.shape_cast %7 : vector<8x16x64xbf16> to vector<128x64xbf16>
    %9 = vector.extract_strided_slice %1 {offsets = [0, 1, 0], sizes = [8, 16, 64], strides = [1, 1, 1]} : vector<8x18x64xbf16> to vector<8x16x64xbf16>
    %10 = vector.shape_cast %9 : vector<8x16x64xbf16> to vector<128x64xbf16>
    %11 = vector.extract_strided_slice %1 {offsets = [0, 2, 0], sizes = [8, 16, 64], strides = [1, 1, 1]} : vector<8x18x64xbf16> to vector<8x16x64xbf16>
    %12 = vector.shape_cast %11 : vector<8x16x64xbf16> to vector<128x64xbf16>
    %13 = vector.extract_strided_slice %6 {offsets = [0, 0, 0], sizes = [2, 16, 64], strides = [1, 1, 1]} : vector<2x18x64xbf16> to vector<2x16x64xbf16>
    %14 = vector.shape_cast %13 : vector<2x16x64xbf16> to vector<32x64xbf16>
    %15 = vector.extract_strided_slice %6 {offsets = [0, 1, 0], sizes = [2, 16, 64], strides = [1, 1, 1]} : vector<2x18x64xbf16> to vector<2x16x64xbf16>
    %16 = vector.shape_cast %15 : vector<2x16x64xbf16> to vector<32x64xbf16>
    %17 = vector.extract_strided_slice %6 {offsets = [0, 2, 0], sizes = [2, 16, 64], strides = [1, 1, 1]} : vector<2x18x64xbf16> to vector<2x16x64xbf16>
    %18 = vector.shape_cast %17 : vector<2x16x64xbf16> to vector<32x64xbf16>
    %19 = tpu.concatenate %8, %10, %12 in 1 : vector<128x64xbf16>, vector<128x64xbf16>, vector<128x64xbf16> -> vector<128x192xbf16>
    %20 = tpu.concatenate %14, %16, %18 in 1 : vector<32x64xbf16>, vector<32x64xbf16>, vector<32x64xbf16> -> vector<32x192xbf16>
    %c0_11 = arith.constant 0 : index
    %c0_12 = arith.constant 0 : index
    %c0_13 = arith.constant 0 : index
    %21 = vector.load %arg5[%c0_11, %c0_12, %c0_13] : memref<3x192x128xbf16, #tpu.memory_space<vmem>>, vector<1x192x128xbf16>
    %22 = vector.shape_cast %21 : vector<1x192x128xbf16> to vector<192x128xbf16>
    %cst = arith.constant dense<0.000000e+00> : vector<128x128xf32>
    %23 = tpu.matmul %19, %22, %cst {dimension_numbers = #tpu.dot_dimension_numbers<[1], [0], [0], [1], [0, 0, 1, 1], [], []>} : vector<128x192xbf16>, vector<192x128xbf16>, vector<128x128xf32> -> vector<128x128xf32>
    %24 = vector.extract_strided_slice %19 {offsets = [16, 0], sizes = [112, 192], strides = [1, 1]} : vector<128x192xbf16> to vector<112x192xbf16>
    %25 = vector.extract_strided_slice %20 {offsets = [0, 0], sizes = [16, 192], strides = [1, 1]} : vector<32x192xbf16> to vector<16x192xbf16>
    %26 = tpu.concatenate %24, %25 in 0 : vector<112x192xbf16>, vector<16x192xbf16> -> vector<128x192xbf16>
    %c1 = arith.constant 1 : index
    %c0_14 = arith.constant 0 : index
    %c0_15 = arith.constant 0 : index
    %27 = vector.load %arg5[%c1, %c0_14, %c0_15] : memref<3x192x128xbf16, #tpu.memory_space<vmem>>, vector<1x192x128xbf16>
    %28 = vector.shape_cast %27 : vector<1x192x128xbf16> to vector<192x128xbf16>
    %cst_16 = arith.constant dense<0.000000e+00> : vector<128x128xf32>
    %29 = tpu.matmul %26, %28, %cst_16 {dimension_numbers = #tpu.dot_dimension_numbers<[1], [0], [0], [1], [0, 0, 1, 1], [], []>} : vector<128x192xbf16>, vector<192x128xbf16>, vector<128x128xf32> -> vector<128x128xf32>
    %30 = arith.addf %23, %29 : vector<128x128xf32>
    %31 = vector.extract_strided_slice %19 {offsets = [32, 0], sizes = [96, 192], strides = [1, 1]} : vector<128x192xbf16> to vector<96x192xbf16>
    %32 = tpu.concatenate %31, %20 in 0 : vector<96x192xbf16>, vector<32x192xbf16> -> vector<128x192xbf16>
    %c2 = arith.constant 2 : index
    %c0_17 = arith.constant 0 : index
    %c0_18 = arith.constant 0 : index
    %33 = vector.load %arg5[%c2, %c0_17, %c0_18] : memref<3x192x128xbf16, #tpu.memory_space<vmem>>, vector<1x192x128xbf16>
    %34 = vector.shape_cast %33 : vector<1x192x128xbf16> to vector<192x128xbf16>
    %cst_19 = arith.constant dense<0.000000e+00> : vector<128x128xf32>
    %35 = tpu.matmul %32, %34, %cst_19 {dimension_numbers = #tpu.dot_dimension_numbers<[1], [0], [0], [1], [0, 0, 1, 1], [], []>} : vector<128x192xbf16>, vector<192x128xbf16>, vector<128x128xf32> -> vector<128x128xf32>
    %36 = arith.addf %30, %35 : vector<128x128xf32>
    %c0_20 = arith.constant 0 : index
    %c0_21 = arith.constant 0 : index
    %37 = vector.load %arg6[%c0_20, %c0_21] : memref<1x128xf32, #tpu.memory_space<vmem>>, vector<1x128xf32>
    %38 = vector.broadcast %37 : vector<1x128xf32> to vector<128x128xf32>
    %39 = arith.addf %36, %38 : vector<128x128xf32>
    %cst_22 = arith.constant 0.000000e+00 : f32
    %40 = vector.broadcast %cst_22 : f32 to vector<128x128xf32>
    %41 = arith.maximumf %39, %40 : vector<128x128xf32>
    %42 = arith.truncf %41 : vector<128x128xf32> to vector<128x128xbf16>
    %c0_23 = arith.constant 0 : index
    %c0_24 = arith.constant 0 : index
    %c0_25 = arith.constant 0 : index
    %c0_26 = arith.constant 0 : index
    %43 = vector.load %arg7[%c0_23, %c0_24, %c0_25, %c0_26] : memref<1x1x128x128xbf16, #tpu.memory_space<vmem>>, vector<1x1x128x128xbf16>
    %44 = vector.shape_cast %43 : vector<1x1x128x128xbf16> to vector<128x128xbf16>
    %45 = vector.shape_cast %42 : vector<128x128xbf16> to vector<1x1x128x128xbf16>
    tpu.vector_store %arg7[%c0_23, %c0_24, %c0_25, %c0_26], %45 {strides = array<i32>} : memref<1x1x128x128xbf16, #tpu.memory_space<vmem>>, vector<1x1x128x128xbf16>,
    %46 = vector.shape_cast %41 : vector<128x128xf32> to vector<4x2x16x128xf32>
    %cst_27 = arith.constant dense<0xFF800000> : vector<4x16x128xf32>
    %47 = vector.multi_reduction <maximumf>, %46, %cst_27 [1] : vector<4x2x16x128xf32> to vector<4x16x128xf32>
    %48 = vector.shape_cast %47 : vector<4x16x128xf32> to vector<4x8x2x128xf32>
    %cst_28 = arith.constant dense<0xFF800000> : vector<4x8x128xf32>
    %49 = vector.multi_reduction <maximumf>, %48, %cst_28 [2] : vector<4x8x2x128xf32> to vector<4x8x128xf32>
    %50 = vector.shape_cast %49 : vector<4x8x128xf32> to vector<32x128xf32>
    %51 = arith.truncf %50 : vector<32x128xf32> to vector<32x128xbf16>
    %c0_29 = arith.constant 0 : index
    %c0_30 = arith.constant 0 : index
    %c0_31 = arith.constant 0 : index
    %c0_32 = arith.constant 0 : index
    %52 = vector.load %arg8[%c0_29, %c0_30, %c0_31, %c0_32] : memref<1x1x32x128xbf16, #tpu.memory_space<vmem>>, vector<1x1x32x128xbf16>
    %53 = vector.shape_cast %52 : vector<1x1x32x128xbf16> to vector<32x128xbf16>
    %54 = vector.shape_cast %51 : vector<32x128xbf16> to vector<1x1x32x128xbf16>
    tpu.vector_store %arg8[%c0_29, %c0_30, %c0_31, %c0_32], %54 {strides = array<i32>} : memref<1x1x32x128xbf16, #tpu.memory_space<vmem>>, vector<1x1x32x128xbf16>,
    return
  }
  func.func @transform_0(%arg0: i32, %arg1: i32) -> (i32, i32, i32, i32) {
    %c0_i32 = arith.constant 0 : i32
    %c0_i32_0 = arith.constant 0 : i32
    %c0_i32_1 = arith.constant 0 : i32
    return %arg0, %arg1, %c0_i32, %c0_i32_0 : i32, i32, i32, i32
  }
  func.func @transform_1(%arg0: i32, %arg1: i32) -> (i32, i32, i32, i32) {
    %c8_i32 = arith.constant 8 : i32
    %0 = arith.muli %arg1, %c8_i32 : i32
    %c8_i32_0 = arith.constant 8 : i32
    %1 = arith.addi %0, %c8_i32_0 : i32
    %c0_i32 = arith.constant 0 : i32
    %c0_i32_1 = arith.constant 0 : i32
    %c0_i32_2 = arith.constant 0 : i32
    return %arg0, %1, %c0_i32, %c0_i32_1 : i32, i32, i32, i32
  }
  func.func @transform_2(%arg0: i32, %arg1: i32) -> (i32, i32, i32, i32) {
    %c8_i32 = arith.constant 8 : i32
    %0 = arith.muli %arg1, %c8_i32 : i32
    %c8_i32_0 = arith.constant 8 : i32
    %1 = arith.addi %0, %c8_i32_0 : i32
    %c1_i32 = arith.constant 1 : i32
    %2 = arith.addi %1, %c1_i32 : i32
    %c0_i32 = arith.constant 0 : i32
    %c0_i32_1 = arith.constant 0 : i32
    %c0_i32_2 = arith.constant 0 : i32
    return %arg0, %2, %c0_i32, %c0_i32_1 : i32, i32, i32, i32
  }
  func.func @transform_3(%arg0: i32, %arg1: i32) -> (i32, i32, i32) {
    %c0_i32 = arith.constant 0 : i32
    %c0_i32_0 = arith.constant 0 : i32
    %c0_i32_1 = arith.constant 0 : i32
    %c0_i32_2 = arith.constant 0 : i32
    return %c0_i32, %c0_i32_0, %c0_i32_1 : i32, i32, i32
  }
  func.func @transform_4(%arg0: i32, %arg1: i32) -> (i32, i32) {
    %c0_i32 = arith.constant 0 : i32
    %c0_i32_0 = arith.constant 0 : i32
    %c0_i32_1 = arith.constant 0 : i32
    return %c0_i32, %c0_i32_0 : i32, i32
  }
  func.func @transform_5(%arg0: i32, %arg1: i32) -> (i32, i32, i32, i32) {
    %c0_i32 = arith.constant 0 : i32
    %c0_i32_0 = arith.constant 0 : i32
    %c0_i32_1 = arith.constant 0 : i32
    return %arg0, %arg1, %c0_i32, %c0_i32_0 : i32, i32, i32, i32
  }
  func.func @transform_6(%arg0: i32, %arg1: i32) -> (i32, i32, i32, i32) {
    %c0_i32 = arith.constant 0 : i32
    %c0_i32_0 = arith.constant 0 : i32
    %c0_i32_1 = arith.constant 0 : i32
    return %arg0, %arg1, %c0_i32, %c0_i32_0 : i32, i32, i32, i32
  }
}

</mosaic_0001>

<llo_original>
// kernel: tpu_custom_call.1
$region0: #{tpu_custom_call.1}
  #allocation0 [shape = 'u32[]', space=smem, size = 0x4, offset = 0x4, fixed_abs, tag = 'smem constant byte address 0x4 - core index']
  #allocation1 [shape = 'u32[144,128]{1,0:T(1,128)}', space=vmem, size = 0x12000, scoped, tag = 'internal scratch']
  %s0 = inlined_call_operand.hbm [shape: bf16[1,18,18,64], index: 0, kind: input, shape index: {}]
  %s1 = inlined_call_operand.hbm [shape: bf16[1,18,18,64], index: 1, kind: input, shape index: {}]
  %s2 = inlined_call_operand.hbm [shape: bf16[1,18,18,64], index: 2, kind: input, shape index: {}]
  %s3 = inlined_call_operand.hbm [shape: bf16[3,192,128], index: 3, kind: input, shape index: {}]
  %s4 = inlined_call_operand.vmem [shape: f32[1,128], index: 4, kind: input, shape index: {}]
  %s5 = inlined_call_operand.hbm [shape: bf16[1,2,128,128], index: 5, kind: output, shape index: {0}]
  %s6 = inlined_call_operand.hbm [shape: bf16[1,2,32,128], index: 6, kind: output, shape index: {1}]
  %7 = xla_tuple %s5, %s6
  %s8 = sld [smem:[#allocation0]]
  $region77: #{tpu_custom_call.1} parent=0
    _
  %s10 = ssub.s32 1, %s8
  %s11 = scalar_select 0, %s10, %s8
  $region1: #{tpu_custom_call.1} parent=0
    #allocation2 [shape = 'u8[98304]{0}', space=vmem, size = 0x18000, scoped, tag = 'input window, operand 0']
    #allocation3 [shape = 's32[2]{0}', space=sflag, size = 0x8, scoped, tag = 'scoped memory for tpu_custom_call.1']
    #allocation4 [shape = 's32[2]{0}', space=sflag, size = 0x8, scoped, tag = 'scoped memory for tpu_custom_call.1']
    #allocation5 [shape = 'u8[12288]{0}', space=vmem, size = 0x3000, scoped, tag = 'input window, operand 1']
    #allocation6 [shape = 's32[2]{0}', space=sflag, size = 0x8, scoped, tag = 'scoped memory for tpu_custom_call.1']
    #allocation7 [shape = 'u8[12288]{0}', space=vmem, size = 0x3000, scoped, tag = 'input window, operand 2']
    #allocation8 [shape = 'u8[147456]{0}', space=vmem, size = 0x24000, scoped, tag = 'input window, operand 3, single buffered']
    #allocation9 [shape = 's32[1]{0}', space=sflag, size = 0x4, scoped, tag = 'scoped memory for tpu_custom_call.1']
    #allocation10 [shape = 'u8[65536]{0}', space=vmem, size = 0x10000, scoped, tag = 'output window, operand 0']
    #allocation11 [shape = 'u8[16384]{0}', space=vmem, size = 0x4000, scoped, tag = 'output window, operand 1']
    #allocation12 [shape = 's32[2]{0}', space=sflag, size = 0x8, scoped, tag = 'scoped memory for tpu_custom_call.1']
    %12 = vsyncpa [#allocation3], 0
    %s13 = scalar_lea.sflag [#allocation3], 1
    %14 = vsyncpa %s13, 0
    %15 = vsyncpa [#allocation6], 0
    %s16 = scalar_lea.sflag [#allocation6], 1
    %17 = vsyncpa %s16, 0
    %18 = vsyncpa [#allocation9], 0
    %19 = vsyncpa [#allocation4], 0
    %s20 = scalar_lea.sflag [#allocation4], 1
    %21 = vsyncpa %s20, 0
    %22 = vsyncpa [#allocation12], 0
    %s23 = scalar_lea.sflag [#allocation12], 1
    %24 = vsyncpa %s23, 0
    loop: start=0, step=1, limit=4
    $region2: #{tpu_custom_call.1} parent=1 // loop_pre_header
      _
    $region3: #{tpu_custom_call.1} parent=1 // loop_header
      %s26 = sphi 0, %s30
      %p27 = scmp.ge.s32.totalorder %s26, 4
      %s33 = sphi 0, %s45
      %s34 = sphi 0, %s41
      %s35 = sphi 0, %s33
      %s36 = sphi 0, %s34
      %s37 = sphi 0, %s35
      %s38 = sphi 0, %s36
      %s50 = sphi 0, %s52
      %s53 = sphi 0, %s50
      %s54 = sphi 0, %s53
      %s70 = sphi 0, %s54
      %s82 = sphi 0, %s84
      %s85 = sphi 0, %s82
      %s86 = sphi 0, %s85
      %s102 = sphi 0, %s86
      %s114 = sphi 0, %s116
      %s117 = sphi 0, %s114
      %s118 = sphi 0, %s117
      %s134 = sphi 0, %s118
      %s138 = sphi 0, %s138
      %s140 = sphi 0, %s138
      %s141 = sphi 0, %s140
      %s155 = sphi 0, %s141
      %s159 = sphi 0, %s159
      %s161 = sphi 0, %s159
      %s162 = sphi 0, %s161
      %s176 = sphi 0, %s162
      %s184 = sphi 0, %s186
      %s187 = sphi 0, %s184
      %s188 = sphi 0, %s187
      %s204 = sphi 0, %s188
      %s212 = sphi 0, %s214
      %s215 = sphi 0, %s212
      %s216 = sphi 0, %s215
      %s232 = sphi 0, %s216
    $region4: #{tpu_custom_call.1} parent=1 // loop_header_branch
      %29 = sbr.rel (%p27) target = $region8
    $region5: #{tpu_custom_call.1} parent=1 // loop_body
      %s31 = ssub.s32 %s26, 1
      %s32 = ssub.s32 %s26, 2
      %s39 = sadd.s32 1, %s34
      %p40 = scmp.ge.s32.totalorder %s39, 2
      %s41 = scalar_select %p40, 0, %s39
      %s42 = sadd.s32 1, %s33
      %s43 = scalar_select %p40, %s42, %s33
      %p44 = scmp.ge.s32.totalorder %s43, 1
      %s45 = scalar_select %p44, 0, %s43
      %s46 = ssub.s32 %s33, %s45
      %s47 = ssub.s32 %s34, %s41
      %s48 = sor.u32 %s46, %s47
      %p49 = scmp.eq.s32.totalorder %s48, 0
      %s51 = sadd.s32 %s50, 1
      %s52 = scalar_select %p49, %s50, %s51
      %p55 = pneg %p49
      %p56 = scmp.eq.s32.totalorder %s26, 1
      %p57 = por %p55, %p56
      %p58 = scmp.ne.s32.totalorder %s50, %s53
      %p59 = scmp.eq.s32.totalorder %s26, 0
      %p60 = por %p58, %p59
      %p61 = scmp.ne.s32.totalorder %s50, %s53
      %p62 = scmp.eq.s32.totalorder %s31, 1
      %p63 = por %p61, %p62
      %p64 = scmp.ne.s32.totalorder %s53, %s54
      %p65 = scmp.eq.s32.totalorder %s31, 0
      %p66 = por %p64, %p65
      %p67 = scmp.ne.s32.totalorder %s53, %s54
      %p68 = scmp.eq.s32.totalorder %s32, 1
      %p69 = por %p67, %p68
      %p71 = scmp.ne.s32.totalorder %s54, %s70
      %p72 = scmp.eq.s32.totalorder %s32, 0
      %p73 = por %p71, %p72
      %s74 = smul.u32 %s34, 8
      %s75 = sadd.s32 %s74, 8
      %s76 = smul.u32 %s41, 8
      %s77 = sadd.s32 %s76, 8
      %s78 = ssub.s32 %s33, %s45
      %s79 = ssub.s32 %s75, %s77
      %s80 = sor.u32 %s78, %s79
      %p81 = scmp.eq.s32.totalorder %s80, 0
      %s83 = sadd.s32 %s82, 1
      %s84 = scalar_select %p81, %s82, %s83
      %p87 = pneg %p81
      %p88 = scmp.eq.s32.totalorder %s26, 1
      %p89 = por %p87, %p88
      %p90 = scmp.ne.s32.totalorder %s82, %s85
      %p91 = scmp.eq.s32.totalorder %s26, 0
      %p92 = por %p90, %p91
      %p93 = scmp.ne.s32.totalorder %s82, %s85
      %p94 = scmp.eq.s32.totalorder %s31, 1
      %p95 = por %p93, %p94
      %p96 = scmp.ne.s32.totalorder %s85, %s86
      %p97 = scmp.eq.s32.totalorder %s31, 0
      %p98 = por %p96, %p97
      %p99 = scmp.ne.s32.totalorder %s85, %s86
      %p100 = scmp.eq.s32.totalorder %s32, 1
      %p101 = por %p99, %p100
      %p103 = scmp.ne.s32.totalorder %s86, %s102
      %p104 = scmp.eq.s32.totalorder %s32, 0
      %p105 = por %p103, %p104
      %s106 = smul.u32 %s34, 8
      %s107 = sadd.s32 %s106, 9
      %s108 = smul.u32 %s41, 8
      %s109 = sadd.s32 %s108, 9
      %s110 = ssub.s32 %s33, %s45
      %s111 = ssub.s32 %s107, %s109
      %s112 = sor.u32 %s110, %s111
      %p113 = scmp.eq.s32.totalorder %s112, 0
      %s115 = sadd.s32 %s114, 1
      %s116 = scalar_select %p113, %s114, %s115
      %p119 = pneg %p113
      %p120 = scmp.eq.s32.totalorder %s26, 1
      %p121 = por %p119, %p120
      %p122 = scmp.ne.s32.totalorder %s114, %s117
      %p123 = scmp.eq.s32.totalorder %s26, 0
      %p124 = por %p122, %p123
      %p125 = scmp.ne.s32.totalorder %s114, %s117
      %p126 = scmp.eq.s32.totalorder %s31, 1
      %p127 = por %p125, %p126
      %p128 = scmp.ne.s32.totalorder %s117, %s118
      %p129 = scmp.eq.s32.totalorder %s31, 0
      %p130 = por %p128, %p129
      %p131 = scmp.ne.s32.totalorder %s117, %s118
      %p132 = scmp.eq.s32.totalorder %s32, 1
      %p133 = por %p131, %p132
      %p135 = scmp.ne.s32.totalorder %s118, %s134
      %p136 = scmp.eq.s32.totalorder %s32, 0
      %p137 = por %p135, %p136
      %s139 = sadd.s32 %s138, 1
      %p142 = scmp.eq.s32.totalorder %s26, 1
      %p143 = scmp.ne.s32.totalorder %s138, %s140
      %p144 = scmp.eq.s32.totalorder %s26, 0
      %p145 = por %p143, %p144
      %p146 = scmp.ne.s32.totalorder %s138, %s140
      %p147 = scmp.eq.s32.totalorder %s31, 1
      %p148 = por %p146, %p147
      %p149 = scmp.ne.s32.totalorder %s140, %s141
      %p150 = scmp.eq.s32.totalorder %s31, 0
      %p151 = por %p149, %p150
      %p152 = scmp.ne.s32.totalorder %s140, %s141
      %p153 = scmp.eq.s32.totalorder %s32, 1
      %p154 = por %p152, %p153
      %p156 = scmp.ne.s32.totalorder %s141, %s155
      %p157 = scmp.eq.s32.totalorder %s32, 0
      %p158 = por %p156, %p157
      %s160 = sadd.s32 %s159, 1
      %p163 = scmp.eq.s32.totalorder %s26, 1
      %p164 = scmp.ne.s32.totalorder %s159, %s161
      %p165 = scmp.eq.s32.totalorder %s26, 0
      %p166 = por %p164, %p165
      %p167 = scmp.ne.s32.totalorder %s159, %s161
      %p168 = scmp.eq.s32.totalorder %s31, 1
      %p169 = por %p167, %p168
      %p170 = scmp.ne.s32.totalorder %s161, %s162
      %p171 = scmp.eq.s32.totalorder %s31, 0
      %p172 = por %p170, %p171
      %p173 = scmp.ne.s32.totalorder %s161, %s162
      %p174 = scmp.eq.s32.totalorder %s32, 1
      %p175 = por %p173, %p174
      %p177 = scmp.ne.s32.totalorder %s162, %s176
      %p178 = scmp.eq.s32.totalorder %s32, 0
      %p179 = por %p177, %p178
      %s180 = ssub.s32 %s33, %s45
      %s181 = ssub.s32 %s34, %s41
      %s182 = sor.u32 %s180, %s181
      %p183 = scmp.eq.s32.totalorder %s182, 0
      %s185 = sadd.s32 %s184, 1
      %s186 = scalar_select %p183, %s184, %s185
      %p189 = pneg %p183
      %p190 = scmp.eq.s32.totalorder %s26, 1
      %p191 = por %p189, %p190
      %p192 = scmp.ne.s32.totalorder %s184, %s187
      %p193 = scmp.eq.s32.totalorder %s26, 0
      %p194 = por %p192, %p193
      %p195 = scmp.ne.s32.totalorder %s184, %s187
      %p196 = scmp.eq.s32.totalorder %s31, 1
      %p197 = por %p195, %p196
      %p198 = scmp.ne.s32.totalorder %s187, %s188
      %p199 = scmp.eq.s32.totalorder %s31, 0
      %p200 = por %p198, %p199
      %p201 = scmp.ne.s32.totalorder %s187, %s188
      %p202 = scmp.eq.s32.totalorder %s32, 1
      %p203 = por %p201, %p202
      %p205 = scmp.ne.s32.totalorder %s188, %s204
      %p206 = scmp.eq.s32.totalorder %s32, 0
      %p207 = por %p205, %p206
      %s208 = ssub.s32 %s33, %s45
      %s209 = ssub.s32 %s34, %s41
      %s210 = sor.u32 %s208, %s209
      %p211 = scmp.eq.s32.totalorder %s210, 0
      %s213 = sadd.s32 %s212, 1
      %s214 = scalar_select %p211, %s212, %s213
      %p217 = pneg %p211
      %p218 = scmp.eq.s32.totalorder %s26, 1
      %p219 = por %p217, %p218
      %p220 = scmp.ne.s32.totalorder %s212, %s215
      %p221 = scmp.eq.s32.totalorder %s26, 0
      %p222 = por %p220, %p221
      %p223 = scmp.ne.s32.totalorder %s212, %s215
      %p224 = scmp.eq.s32.totalorder %s31, 1
      %p225 = por %p223, %p224
      %p226 = scmp.ne.s32.totalorder %s215, %s216
      %p227 = scmp.eq.s32.totalorder %s31, 0
      %p228 = por %p226, %p227
      %p229 = scmp.ne.s32.totalorder %s215, %s216
      %p230 = scmp.eq.s32.totalorder %s32, 1
      %p231 = por %p229, %p230
      %p233 = scmp.ne.s32.totalorder %s216, %s232
      %p234 = scmp.eq.s32.totalorder %s32, 0
      %p235 = por %p233, %p234
      %p236 = scmp.le.s32.totalorder 1, %s26
      %p237 = scmp.lt.s32.totalorder %s26, 3
      %p238 = pnand %p236, %p237
      %p239 = pneg %p238
      // Predicated region
      $region9: #{tpu_custom_call.1} parent=5 // pred_check
        _
      $region10: #{tpu_custom_call.1} parent=5 // pred_check_branch
        %241 = sbr.rel (%p238) target = $region12
      $region11: #{tpu_custom_call.1} parent=5 // pred_region
        %s242 = ssub.s32 %s26, 1
        // Predicated region
        $region13: #{tpu_custom_call.1} parent=11 // pred_check
          %p243 = pneg %p151
        $region14: #{tpu_custom_call.1} parent=11 // pred_check_branch
          %245 = sbr.rel (%p243) target = $region16
        $region15: #{tpu_custom_call.1} parent=11 // pred_region
          %s247 = ssub.s32 4608, 4608
          %248 = vsyncadd [#allocation9], %s247
          %s249 = sshll.u32 [#allocation8], 4
          %s250 = int_to_ptr.vmem [resolvable:$true] %s249
          %255 = dma.hbm_to_vmem [thread:$0]  %s3, 4608, %s250, [#allocation9], 64, 64, 4
        $region16: #{tpu_custom_call.1} parent=11 // pred_fallthru
          _
        // Predicated region
        $region17: #{tpu_custom_call.1} parent=11 // pred_check
          %p256 = pneg %p172
        $region18: #{tpu_custom_call.1} parent=11 // pred_check_branch
          %258 = sbr.rel (%p256) target = $region20
        $region19: #{tpu_custom_call.1} parent=11 // pred_region
          _
        $region20: #{tpu_custom_call.1} parent=11 // pred_fallthru
          _
      $region12: #{tpu_custom_call.1} parent=5 // pred_fallthru
        _
      %p259 = scmp.lt.s32.totalorder %s26, 2
      // Predicated region
      $region21: #{tpu_custom_call.1} parent=5 // pred_check
        %p260 = pneg %p259
      $region22: #{tpu_custom_call.1} parent=5 // pred_check_branch
        %262 = sbr.rel (%p260) target = $region24
      $region23: #{tpu_custom_call.1} parent=5 // pred_region
        // Predicated region
        $region25: #{tpu_custom_call.1} parent=23 // pred_check
          %p263 = pneg %p60
        $region26: #{tpu_custom_call.1} parent=23 // pred_check_branch
          %265 = sbr.rel (%p263) target = $region28
        $region27: #{tpu_custom_call.1} parent=23 // pred_region
          %s266 = sand.u32 %s50, 1
          %s267 = scalar_lea.sflag [#allocation3], %s266
          %s268 = sand.u32 %s50, 1
          %s269 = smul.addr %s268, 96
          %s270 = scalar_lea.vmem [#allocation2], %s269
          %s271 = smul.u32 8, %s34
          %s272 = ssub.s32 18, %s271
          %p273 = scmp.lt.s32.totalorder %s272, 8
          %s274 = scalar_select %p273, %s272, 8
          %s275 = smul.u32 64, %s274
          %s276 = smul.u32 %s275, 3
          %s278 = ssub.s32 1536, %s276
          %279 = vsyncadd %s267, %s278
          %p280 = scmp.ne.s32.totalorder 0, %s276
          %s281 = smul.addr %s271, 3
          %s282 = smul.addr %s33, 54
          %s283 = sadd.s32 %s281, %s282
          %s284 = smul.addr %s283, 64
          %s285 = scalar_lea.hbm %s0, %s284
          %s286 = smul.u32 %s274, 3
          %s287 = smul.u32 4, %s286
          %s288 = sshll.u32 %s270, 4
          %s289 = int_to_ptr.vmem [resolvable:$true] %s288
          %s290 = sshll.u32 %s287, 4
          %294 = dma.hbm_to_vmem [thread:$0]  (%p280), %s285, %s290, %s289, %s267, 64, 64, 4
        $region28: #{tpu_custom_call.1} parent=23 // pred_fallthru
          _
        // Predicated region
        $region29: #{tpu_custom_call.1} parent=23 // pred_check
          %p295 = pneg %p92
        $region30: #{tpu_custom_call.1} parent=23 // pred_check_branch
          %297 = sbr.rel (%p295) target = $region32
        $region31: #{tpu_custom_call.1} parent=23 // pred_region
          %s298 = sand.u32 %s26, 1
          %s299 = scalar_lea.sflag [#allocation6], %s298
          %s300 = sand.u32 %s82, 1
          %s301 = smul.addr %s300, 12
          %s302 = scalar_lea.vmem [#allocation5], %s301
          %s303 = smul.u32 %s34, 8
          %s304 = sadd.s32 %s303, 8
          %s306 = ssub.s32 192, 192
          %307 = vsyncadd %s299, %s306
          %s308 = smul.addr %s304, 3
          %s309 = smul.addr %s33, 54
          %s310 = sadd.s32 %s308, %s309
          %s311 = smul.addr %s310, 64
          %s312 = scalar_lea.hbm %s1, %s311
          %s313 = sshll.u32 %s302, 4
          %s314 = int_to_ptr.vmem [resolvable:$true] %s313
          %319 = dma.hbm_to_vmem [thread:$0]  %s312, 192, %s314, %s299, 64, 64, 4
        $region32: #{tpu_custom_call.1} parent=23 // pred_fallthru
          _
        // Predicated region
        $region33: #{tpu_custom_call.1} parent=23 // pred_check
          %p320 = pneg %p124
        $region34: #{tpu_custom_call.1} parent=23 // pred_check_branch
          %322 = sbr.rel (%p320) target = $region36
        $region35: #{tpu_custom_call.1} parent=23 // pred_region
          %s323 = sand.u32 %s26, 1
          %s324 = scalar_lea.sflag [#allocation6], %s323
          %s325 = sand.u32 %s114, 1
          %s326 = smul.addr %s325, 12
          %s327 = scalar_lea.vmem [#allocation7], %s326
          %s328 = smul.u32 %s34, 8
          %s329 = sadd.s32 %s328, 9
          %s331 = ssub.s32 192, 192
          %332 = vsyncadd %s324, %s331
          %s333 = smul.addr %s329, 3
          %s334 = smul.addr %s33, 54
          %s335 = sadd.s32 %s333, %s334
          %s336 = smul.addr %s335, 64
          %s337 = scalar_lea.hbm %s2, %s336
          %s338 = sshll.u32 %s327, 4
          %s339 = int_to_ptr.vmem [resolvable:$true] %s338
          %344 = dma.hbm_to_vmem [thread:$0]  %s337, 192, %s339, %s324, 64, 64, 4
        $region36: #{tpu_custom_call.1} parent=23 // pred_fallthru
          _
      $region24: #{tpu_custom_call.1} parent=5 // pred_fallthru
        _
      %p345 = scmp.le.s32.totalorder 1, %s26
      %p346 = scmp.lt.s32.totalorder %s26, 3
      %p347 = pnand %p345, %p346
      %p348 = pneg %p347
      // Predicated region
      $region37: #{tpu_custom_call.1} parent=5 // pred_check
        _
      $region38: #{tpu_custom_call.1} parent=5 // pred_check_branch
        %350 = sbr.rel (%p347) target = $region40
      $region39: #{tpu_custom_call.1} parent=5 // pred_region
        %s351 = ssub.s32 %s26, 1
        %s352 = sand.u32 %s53, 1
        %s353 = scalar_lea.sflag [#allocation3], %s352
        %s354 = sand.u32 %s53, 1
        %s355 = smul.addr %s354, 96
        %s356 = scalar_lea.vmem [#allocation2], %s355
        // Predicated region
        $region41: #{tpu_custom_call.1} parent=39 // pred_check
          %p357 = pneg %p66
        $region42: #{tpu_custom_call.1} parent=39 // pred_check_branch
          %359 = sbr.rel (%p357) target = $region44
        $region43: #{tpu_custom_call.1} parent=39 // pred_region
          %360 = dma.done %s353, 1536
        $region44: #{tpu_custom_call.1} parent=39 // pred_fallthru
          _
        %s361 = sand.u32 %s31, 1
        %s362 = scalar_lea.sflag [#allocation6], %s361
        %s363 = sand.u32 %s85, 1
        %s364 = smul.addr %s363, 12
        %s365 = scalar_lea.vmem [#allocation5], %s364
        // Predicated region
        $region45: #{tpu_custom_call.1} parent=39 // pred_check
          %p366 = pneg %p98
        $region46: #{tpu_custom_call.1} parent=39 // pred_check_branch
          %368 = sbr.rel (%p366) target = $region48
        $region47: #{tpu_custom_call.1} parent=39 // pred_region
          %369 = dma.done %s362, 192
        $region48: #{tpu_custom_call.1} parent=39 // pred_fallthru
          _
        %s370 = sand.u32 %s31, 1
        %s371 = scalar_lea.sflag [#allocation6], %s370
        %s372 = sand.u32 %s117, 1
        %s373 = smul.addr %s372, 12
        %s374 = scalar_lea.vmem [#allocation7], %s373
        // Predicated region
        $region49: #{tpu_custom_call.1} parent=39 // pred_check
          %p375 = pneg %p130
        $region50: #{tpu_custom_call.1} parent=39 // pred_check_branch
          %377 = sbr.rel (%p375) target = $region52
        $region51: #{tpu_custom_call.1} parent=39 // pred_region
          %378 = dma.done %s371, 192
        $region52: #{tpu_custom_call.1} parent=39 // pred_fallthru
          _
        // Predicated region
        $region53: #{tpu_custom_call.1} parent=39 // pred_check
          %p379 = pneg %p151
        $region54: #{tpu_custom_call.1} parent=39 // pred_check_branch
          %381 = sbr.rel (%p379) target = $region56
        $region55: #{tpu_custom_call.1} parent=39 // pred_region
          %382 = dma.done [#allocation9], 4608
        $region56: #{tpu_custom_call.1} parent=39 // pred_fallthru
          _
        %s383 = sand.u32 %s53, 1
        %s384 = scalar_lea.sflag [#allocation3], %s383
        %s385 = sand.u32 %s53, 1
        %s386 = smul.addr %s385, 96
        %s387 = scalar_lea.vmem [#allocation2], %s386
        %p388 = pneg %p66
        %p389 = pneg %p63
        %s390 = sand.u32 %s31, 1
        %s391 = scalar_lea.sflag [#allocation6], %s390
        %s392 = sand.u32 %s85, 1
        %s393 = smul.addr %s392, 12
        %s394 = scalar_lea.vmem [#allocation5], %s393
        %p395 = pneg %p98
        %p396 = pneg %p95
        %s397 = sand.u32 %s31, 1
        %s398 = scalar_lea.sflag [#allocation6], %s397
        %s399 = sand.u32 %s117, 1
        %s400 = smul.addr %s399, 12
        %s401 = scalar_lea.vmem [#allocation7], %s400
        %p402 = pneg %p130
        %p403 = pneg %p127
        %p404 = pneg %p151
        %p405 = pneg %p148
        %p406 = pneg %p172
        %p407 = pneg %p169
        %p408 = pneg %p200
        %p409 = pneg %p197
        %s410 = sand.u32 %s187, 1
        %s411 = scalar_lea.sflag [#allocation4], %s410
        %s412 = sand.u32 %s187, 1
        %s413 = smul.addr %s412, 64
        %s414 = scalar_lea.vmem [#allocation10], %s413
        %p415 = pneg %p228
        %p416 = pneg %p225
        %s417 = sand.u32 %s215, 1
        %s418 = scalar_lea.sflag [#allocation12], %s417
        %s419 = sand.u32 %s215, 1
        %s420 = smul.addr %s419, 16
        %s421 = scalar_lea.vmem [#allocation11], %s420
        %s422 = smul.u32 8, %s36
        %s423 = ssub.s32 18, %s422
        %p424 = scmp.lt.s32.totalorder %s423, 8
        %s425 = scalar_select %p424, %s423, 8
        %s426 = smul.u32 64, %s425
        %s427 = smul.u32 %s426, 3
        %s428 = smul.u32 %s36, 8
        %s429 = sadd.s32 %s428, 8
        %s430 = smul.u32 %s36, 8
        %s431 = sadd.s32 %s430, 9
        %v433 = vld [vmem:[%s356] sm:$0xf]
        %v434 = vld [vmem:[%s356 + $0x4] sm:$0xf]
        %v435 = vld [vmem:[%s356 + $0x8] sm:$0x1]
        %v436 = vld [vmem:[%s356 + $0xc] sm:$0xf]
        %v437 = vld [vmem:[%s356 + $0x10] sm:$0xf]
        %v438 = vld [vmem:[%s356 + $0x14] sm:$0x1]
        %v439 = vld [vmem:[%s356 + $0x18] sm:$0xf]
        %v440 = vld [vmem:[%s356 + $0x1c] sm:$0xf]
        %v441 = vld [vmem:[%s356 + $0x20] sm:$0x1]
        %v442 = vld [vmem:[%s356 + $0x24] sm:$0xf]
        %v443 = vld [vmem:[%s356 + $0x28] sm:$0xf]
        %v444 = vld [vmem:[%s356 + $0x2c] sm:$0x1]
        %v445 = vld [vmem:[%s356 + $0x30] sm:$0xf]
        %v446 = vld [vmem:[%s356 + $0x34] sm:$0xf]
        %v447 = vld [vmem:[%s356 + $0x38] sm:$0x1]
        %v448 = vld [vmem:[%s356 + $0x3c] sm:$0xf]
        %v449 = vld [vmem:[%s356 + $0x40] sm:$0xf]
        %v450 = vld [vmem:[%s356 + $0x44] sm:$0x1]
        %v451 = vld [vmem:[%s356 + $0x48] sm:$0xf]
        %v452 = vld [vmem:[%s356 + $0x4c] sm:$0xf]
        %v453 = vld [vmem:[%s356 + $0x50] sm:$0x1]
        %v454 = vld [vmem:[%s356 + $0x54] sm:$0xf]
        %v455 = vld [vmem:[%s356 + $0x58] sm:$0xf]
        %v456 = vld [vmem:[%s356 + $0x5c] sm:$0x1]
        %v457 = vld [vmem:[%s365] sm:$0xf]
        %v458 = vld [vmem:[%s365 + $0x4] sm:$0xf]
        %v459 = vld [vmem:[%s365 + $0x8] sm:$0x1]
        %v460 = vld [vmem:[%s374] sm:$0xf]
        %v461 = vld [vmem:[%s374 + $0x4] sm:$0xf]
        %v462 = vld [vmem:[%s374 + $0x8] sm:$0x1]
        %vm463 = vsmask.f32 3328
        %vm464 = vsmask.f32 7440
        %vm465 = vmor %vm463, %vm464
        %v467 = vshrl.u32 %v433, 16
        %v469 = vrot.slane %v467, 4
        %v470 = vshll.u32 %v433, 16
        %v472 = vrot.slane %v470, 5
        %v473 = vor.u32 %v469, %v472
        %v474 = vrot.slane %v473, 4
        %v476 = vshll.u32 %v434, 16
        %v478 = vrot.slane %v476, 5
        %v479 = vsel %vm465, %v474, %v478
        %v480 = vshrl.u32 %v434, 16
        %v482 = vrot.slane %v480, 4
        %v483 = vor.u32 %v482, %v478
        %v484 = vrot.slane %v483, 4
        %v486 = vshll.u32 %v435, 16
        %v488 = vrot.slane %v486, 5
        %v489 = vsel %vm465, %v484, %v488
        %v491 = vshrl.u32 %v436, 16
        %v493 = vrot.slane %v491, 4
        %v494 = vshll.u32 %v436, 16
        %v496 = vrot.slane %v494, 5
        %v497 = vor.u32 %v493, %v496
        %v498 = vrot.slane %v497, 4
        %v500 = vshll.u32 %v437, 16
        %v502 = vrot.slane %v500, 5
        %v503 = vsel %vm465, %v498, %v502
        %v504 = vshrl.u32 %v437, 16
        %v506 = vrot.slane %v504, 4
        %v507 = vor.u32 %v506, %v502
        %v508 = vrot.slane %v507, 4
        %v510 = vshll.u32 %v438, 16
        %v512 = vrot.slane %v510, 5
        %v513 = vsel %vm465, %v508, %v512
        %v515 = vshrl.u32 %v439, 16
        %v517 = vrot.slane %v515, 4
        %v518 = vshll.u32 %v439, 16
        %v520 = vrot.slane %v518, 5
        %v521 = vor.u32 %v517, %v520
        %v522 = vrot.slane %v521, 4
        %v524 = vshll.u32 %v440, 16
        %v526 = vrot.slane %v524, 5
        %v527 = vsel %vm465, %v522, %v526
        %v528 = vshrl.u32 %v440, 16
        %v530 = vrot.slane %v528, 4
        %v531 = vor.u32 %v530, %v526
        %v532 = vrot.slane %v531, 4
        %v534 = vshll.u32 %v441, 16
        %v536 = vrot.slane %v534, 5
        %v537 = vsel %vm465, %v532, %v536
        %v539 = vshrl.u32 %v442, 16
        %v541 = vrot.slane %v539, 4
        %v542 = vshll.u32 %v442, 16
        %v544 = vrot.slane %v542, 5
        %v545 = vor.u32 %v541, %v544
        %v546 = vrot.slane %v545, 4
        %v548 = vshll.u32 %v443, 16
        %v550 = vrot.slane %v548, 5
        %v551 = vsel %vm465, %v546, %v550
        %v552 = vshrl.u32 %v443, 16
        %v554 = vrot.slane %v552, 4
        %v555 = vor.u32 %v554, %v550
        %v556 = vrot.slane %v555, 4
        %v558 = vshll.u32 %v444, 16
        %v560 = vrot.slane %v558, 5
        %v561 = vsel %vm465, %v556, %v560
        %v563 = vshrl.u32 %v445, 16
        %v565 = vrot.slane %v563, 4
        %v566 = vshll.u32 %v445, 16
        %v568 = vrot.slane %v566, 5
        %v569 = vor.u32 %v565, %v568
        %v570 = vrot.slane %v569, 4
        %v572 = vshll.u32 %v446, 16
        %v574 = vrot.slane %v572, 5
        %v575 = vsel %vm465, %v570, %v574
        %v576 = vshrl.u32 %v446, 16
        %v578 = vrot.slane %v576, 4
        %v579 = vor.u32 %v578, %v574
        %v580 = vrot.slane %v579, 4
        %v582 = vshll.u32 %v447, 16
        %v584 = vrot.slane %v582, 5
        %v585 = vsel %vm465, %v580, %v584
        %v587 = vshrl.u32 %v448, 16
        %v589 = vrot.slane %v587, 4
        %v590 = vshll.u32 %v448, 16
        %v592 = vrot.slane %v590, 5
        %v593 = vor.u32 %v589, %v592
        %v594 = vrot.slane %v593, 4
        %v596 = vshll.u32 %v449, 16
        %v598 = vrot.slane %v596, 5
        %v599 = vsel %vm465, %v594, %v598
        %v600 = vshrl.u32 %v449, 16
        %v602 = vrot.slane %v600, 4
        %v603 = vor.u32 %v602, %v598
        %v604 = vrot.slane %v603, 4
        %v606 = vshll.u32 %v450, 16
        %v608 = vrot.slane %v606, 5
        %v609 = vsel %vm465, %v604, %v608
        %v611 = vshrl.u32 %v451, 16
        %v613 = vrot.slane %v611, 4
        %v614 = vshll.u32 %v451, 16
        %v616 = vrot.slane %v614, 5
        %v617 = vor.u32 %v613, %v616
        %v618 = vrot.slane %v617, 4
        %v620 = vshll.u32 %v452, 16
        %v622 = vrot.slane %v620, 5
        %v623 = vsel %vm465, %v618, %v622
        %v624 = vshrl.u32 %v452, 16
        %v626 = vrot.slane %v624, 4
        %v627 = vor.u32 %v626, %v622
        %v628 = vrot.slane %v627, 4
        %v630 = vshll.u32 %v453, 16
        %v632 = vrot.slane %v630, 5
        %v633 = vsel %vm465, %v628, %v632
        %v635 = vshrl.u32 %v454, 16
        %v637 = vrot.slane %v635, 4
        %v638 = vshll.u32 %v454, 16
        %v640 = vrot.slane %v638, 5
        %v641 = vor.u32 %v637, %v640
        %v642 = vrot.slane %v641, 4
        %v644 = vshll.u32 %v455, 16
        %v646 = vrot.slane %v644, 5
        %v647 = vsel %vm465, %v642, %v646
        %v648 = vshrl.u32 %v455, 16
        %v650 = vrot.slane %v648, 4
        %v651 = vor.u32 %v650, %v646
        %v652 = vrot.slane %v651, 4
        %v654 = vshll.u32 %v456, 16
        %v656 = vrot.slane %v654, 5
        %v657 = vsel %vm465, %v652, %v656
        %vm682 = vcmask 1042432
        %vm683 = vcmask 1046532
        %vm684 = vmor %vm682, %vm683
        %v685 = vrot.slane %v433, 5
        %v686 = vrot.slane %v685, 4
        %v687 = vrot.slane %v434, 5
        %v688 = vsel %vm684, %v686, %v687
        %v689 = vrot.slane %v687, 4
        %v690 = vrot.slane %v435, 5
        %v691 = vsel %vm684, %v689, %v690
        %v692 = vrot.slane %v436, 5
        %v693 = vrot.slane %v692, 4
        %v694 = vrot.slane %v437, 5
        %v695 = vsel %vm684, %v693, %v694
        %v696 = vrot.slane %v694, 4
        %v697 = vrot.slane %v438, 5
        %v698 = vsel %vm684, %v696, %v697
        %v699 = vrot.slane %v439, 5
        %v700 = vrot.slane %v699, 4
        %v701 = vrot.slane %v440, 5
        %v702 = vsel %vm684, %v700, %v701
        %v703 = vrot.slane %v701, 4
        %v704 = vrot.slane %v441, 5
        %v705 = vsel %vm684, %v703, %v704
        %v706 = vrot.slane %v442, 5
        %v707 = vrot.slane %v706, 4
        %v708 = vrot.slane %v443, 5
        %v709 = vsel %vm684, %v707, %v708
        %v710 = vrot.slane %v708, 4
        %v711 = vrot.slane %v444, 5
        %v712 = vsel %vm684, %v710, %v711
        %v713 = vrot.slane %v445, 5
        %v714 = vrot.slane %v713, 4
        %v715 = vrot.slane %v446, 5
        %v716 = vsel %vm684, %v714, %v715
        %v717 = vrot.slane %v715, 4
        %v718 = vrot.slane %v447, 5
        %v719 = vsel %vm684, %v717, %v718
        %v720 = vrot.slane %v448, 5
        %v721 = vrot.slane %v720, 4
        %v722 = vrot.slane %v449, 5
        %v723 = vsel %vm684, %v721, %v722
        %v724 = vrot.slane %v722, 4
        %v725 = vrot.slane %v450, 5
        %v726 = vsel %vm684, %v724, %v725
        %v727 = vrot.slane %v451, 5
        %v728 = vrot.slane %v727, 4
        %v729 = vrot.slane %v452, 5
        %v730 = vsel %vm684, %v728, %v729
        %v731 = vrot.slane %v729, 4
        %v732 = vrot.slane %v453, 5
        %v733 = vsel %vm684, %v731, %v732
        %v734 = vrot.slane %v454, 5
        %v735 = vrot.slane %v734, 4
        %v736 = vrot.slane %v455, 5
        %v737 = vsel %vm684, %v735, %v736
        %v738 = vrot.slane %v736, 4
        %v739 = vrot.slane %v456, 5
        %v740 = vsel %vm684, %v738, %v739
        %v742 = vshrl.u32 %v457, 16
        %v744 = vrot.slane %v742, 4
        %v745 = vshll.u32 %v457, 16
        %v747 = vrot.slane %v745, 5
        %v748 = vor.u32 %v744, %v747
        %v749 = vrot.slane %v748, 4
        %v751 = vshll.u32 %v458, 16
        %v753 = vrot.slane %v751, 5
        %v754 = vsel %vm465, %v749, %v753
        %v755 = vshrl.u32 %v458, 16
        %v757 = vrot.slane %v755, 4
        %v758 = vor.u32 %v757, %v753
        %v759 = vrot.slane %v758, 4
        %v761 = vshll.u32 %v459, 16
        %v763 = vrot.slane %v761, 5
        %v764 = vsel %vm465, %v759, %v763
        %v766 = vshrl.u32 %v460, 16
        %v768 = vrot.slane %v766, 4
        %v769 = vshll.u32 %v460, 16
        %v771 = vrot.slane %v769, 5
        %v772 = vor.u32 %v768, %v771
        %v773 = vrot.slane %v772, 4
        %v775 = vshll.u32 %v461, 16
        %v777 = vrot.slane %v775, 5
        %v778 = vsel %vm465, %v773, %v777
        %v779 = vshrl.u32 %v461, 16
        %v781 = vrot.slane %v779, 4
        %v782 = vor.u32 %v781, %v777
        %v783 = vrot.slane %v782, 4
        %v785 = vshll.u32 %v462, 16
        %v787 = vrot.slane %v785, 5
        %v788 = vsel %vm465, %v783, %v787
        %v795 = vrot.slane %v457, 5
        %v796 = vrot.slane %v795, 4
        %v797 = vrot.slane %v458, 5
        %v798 = vsel %vm684, %v796, %v797
        %v799 = vrot.slane %v797, 4
        %v800 = vrot.slane %v459, 5
        %v801 = vsel %vm684, %v799, %v800
        %v802 = vrot.slane %v460, 5
        %v803 = vrot.slane %v802, 4
        %v804 = vrot.slane %v461, 5
        %v805 = vsel %vm684, %v803, %v804
        %v806 = vrot.slane %v804, 4
        %v807 = vrot.slane %v462, 5
        %v808 = vsel %vm684, %v806, %v807
        %v809 = vunpack.c.l.b16 %v433
        %v810 = vunpack.c.l.b16 %v434
        %v811 = vunpack.c.l.b16 %v436
        %v812 = vunpack.c.l.b16 %v437
        %v813 = vunpack.c.l.b16 %v439
        %v814 = vunpack.c.l.b16 %v440
        %v815 = vunpack.c.l.b16 %v442
        %v816 = vunpack.c.l.b16 %v443
        %v817 = vunpack.c.l.b16 %v445
        %v818 = vunpack.c.l.b16 %v446
        %v819 = vunpack.c.l.b16 %v448
        %v820 = vunpack.c.l.b16 %v449
        %v821 = vunpack.c.l.b16 %v451
        %v822 = vunpack.c.l.b16 %v452
        %v823 = vunpack.c.l.b16 %v454
        %v824 = vunpack.c.l.b16 %v455
        %v825 = vpack.c.b16 %v810, %v809
        %v826 = vpack.c.b16 %v812, %v811
        %v827 = vpack.c.b16 %v814, %v813
        %v828 = vpack.c.b16 %v816, %v815
        %v829 = vpack.c.b16 %v818, %v817
        %v830 = vpack.c.b16 %v820, %v819
        %v831 = vpack.c.b16 %v822, %v821
        %v832 = vpack.c.b16 %v824, %v823
        %v833 = vunpack.c.l.b16 %v479
        %v834 = vunpack.c.l.b16 %v489
        %v835 = vunpack.c.l.b16 %v503
        %v836 = vunpack.c.l.b16 %v513
        %v837 = vunpack.c.l.b16 %v527
        %v838 = vunpack.c.l.b16 %v537
        %v839 = vunpack.c.l.b16 %v551
        %v840 = vunpack.c.l.b16 %v561
        %v841 = vunpack.c.l.b16 %v575
        %v842 = vunpack.c.l.b16 %v585
        %v843 = vunpack.c.l.b16 %v599
        %v844 = vunpack.c.l.b16 %v609
        %v845 = vunpack.c.l.b16 %v623
        %v846 = vunpack.c.l.b16 %v633
        %v847 = vunpack.c.l.b16 %v647
        %v848 = vunpack.c.l.b16 %v657
        %v849 = vpack.c.b16 %v834, %v833
        %v850 = vpack.c.b16 %v836, %v835
        %v851 = vpack.c.b16 %v838, %v837
        %v852 = vpack.c.b16 %v840, %v839
        %v853 = vpack.c.b16 %v842, %v841
        %v854 = vpack.c.b16 %v844, %v843
        %v855 = vpack.c.b16 %v846, %v845
        %v856 = vpack.c.b16 %v848, %v847
        %857 = vrot.lane.b32.xlu0 %v849, 64
        %v858 = vpop.permute.xlu0 %857
        %859 = vrot.lane.b32.xlu0 %v850, 64
        %v860 = vpop.permute.xlu0 %859
        %861 = vrot.lane.b32.xlu0 %v851, 64
        %v862 = vpop.permute.xlu0 %861
        %863 = vrot.lane.b32.xlu0 %v852, 64
        %v864 = vpop.permute.xlu0 %863
        %865 = vrot.lane.b32.xlu0 %v853, 64
        %v866 = vpop.permute.xlu0 %865
        %867 = vrot.lane.b32.xlu0 %v854, 64
        %v868 = vpop.permute.xlu0 %867
        %869 = vrot.lane.b32.xlu0 %v855, 64
        %v870 = vpop.permute.xlu0 %869
        %871 = vrot.lane.b32.xlu0 %v856, 64
        %v872 = vpop.permute.xlu0 %871
        %v873 = vunpack.c.l.b16 %v688
        %v874 = vunpack.c.l.b16 %v691
        %v875 = vunpack.c.l.b16 %v695
        %v876 = vunpack.c.l.b16 %v698
        %v877 = vunpack.c.l.b16 %v702
        %v878 = vunpack.c.l.b16 %v705
        %v879 = vunpack.c.l.b16 %v709
        %v880 = vunpack.c.l.b16 %v712
        %v881 = vunpack.c.l.b16 %v716
        %v882 = vunpack.c.l.b16 %v719
        %v883 = vunpack.c.l.b16 %v723
        %v884 = vunpack.c.l.b16 %v726
        %v885 = vunpack.c.l.b16 %v730
        %v886 = vunpack.c.l.b16 %v733
        %v887 = vunpack.c.l.b16 %v737
        %v888 = vunpack.c.l.b16 %v740
        %v889 = vpack.c.b16 %v874, %v873
        %v890 = vpack.c.b16 %v876, %v875
        %v891 = vpack.c.b16 %v878, %v877
        %v892 = vpack.c.b16 %v880, %v879
        %v893 = vpack.c.b16 %v882, %v881
        %v894 = vpack.c.b16 %v884, %v883
        %v895 = vpack.c.b16 %v886, %v885
        %v896 = vpack.c.b16 %v888, %v887
        %vm897 = vcmask 523264
        %v900 = vsel %vm897, %v825, %v858
        %v904 = vsel %vm897, %v826, %v860
        %v908 = vsel %vm897, %v827, %v862
        %v912 = vsel %vm897, %v828, %v864
        %v916 = vsel %vm897, %v829, %v866
        %v920 = vsel %vm897, %v830, %v868
        %v924 = vsel %vm897, %v831, %v870
        %v928 = vsel %vm897, %v832, %v872
        %v930 = vunpack.c.l.b16 %v457
        %v931 = vunpack.c.l.b16 %v458
        %v932 = vunpack.c.l.b16 %v460
        %v933 = vunpack.c.l.b16 %v461
        %v934 = vpack.c.b16 %v931, %v930
        %v935 = vpack.c.b16 %v933, %v932
        %v936 = vunpack.c.l.b16 %v754
        %v937 = vunpack.c.l.b16 %v764
        %v938 = vunpack.c.l.b16 %v778
        %v939 = vunpack.c.l.b16 %v788
        %v940 = vpack.c.b16 %v937, %v936
        %v941 = vpack.c.b16 %v939, %v938
        %942 = vrot.lane.b32.xlu0 %v940, 64
        %v943 = vpop.permute.xlu0 %942
        %944 = vrot.lane.b32.xlu0 %v941, 64
        %v945 = vpop.permute.xlu0 %944
        %v946 = vunpack.c.l.b16 %v798
        %v947 = vunpack.c.l.b16 %v801
        %v948 = vunpack.c.l.b16 %v805
        %v949 = vunpack.c.l.b16 %v808
        %v950 = vpack.c.b16 %v947, %v946
        %v951 = vpack.c.b16 %v949, %v948
        %v954 = vsel %vm897, %v934, %v943
        %v958 = vsel %vm897, %v935, %v945
        %v960 = vld [vmem:[#allocation8] sm:$0xf]
        %v961 = vld [vmem:[#allocation8 + $0x4] sm:$0xf]
        %v962 = vld [vmem:[#allocation8 + $0x8] sm:$0xf]
        %v963 = vld [vmem:[#allocation8 + $0xc] sm:$0xf]
        %v964 = vld [vmem:[#allocation8 + $0x10] sm:$0xf]
        %v965 = vld [vmem:[#allocation8 + $0x14] sm:$0xf]
        %v966 = vld [vmem:[#allocation8 + $0x18] sm:$0xf]
        %v967 = vld [vmem:[#allocation8 + $0x1c] sm:$0xf]
        %v968 = vld [vmem:[#allocation8 + $0x20] sm:$0xf]
        %v969 = vld [vmem:[#allocation8 + $0x24] sm:$0xf]
        %v970 = vld [vmem:[#allocation8 + $0x28] sm:$0xf]
        %v971 = vld [vmem:[#allocation8 + $0x2c] sm:$0xf]
        %v972 = vld [vmem:[#allocation8 + $0x30] sm:$0xf]
        %v973 = vld [vmem:[#allocation8 + $0x34] sm:$0xf]
        %v974 = vld [vmem:[#allocation8 + $0x38] sm:$0xf]
        %v975 = vld [vmem:[#allocation8 + $0x3c] sm:$0xf]
        %v976 = vld [vmem:[#allocation8 + $0x40] sm:$0xf]
        %v977 = vld [vmem:[#allocation8 + $0x44] sm:$0xf]
        %v978 = vld [vmem:[#allocation8 + $0x48] sm:$0xf]
        %v979 = vld [vmem:[#allocation8 + $0x4c] sm:$0xf]
        %v980 = vld [vmem:[#allocation8 + $0x50] sm:$0xf]
        %v981 = vld [vmem:[#allocation8 + $0x54] sm:$0xf]
        %v982 = vld [vmem:[#allocation8 + $0x58] sm:$0xf]
        %v983 = vld [vmem:[#allocation8 + $0x5c] sm:$0xf]
        %s984 = scalar_lea.vmem [#allocation8], 96
        %v985 = vld [vmem:[%s984] sm:$0xf]
        %v986 = vld [vmem:[%s984 + $0x4] sm:$0xf]
        %v987 = vld [vmem:[%s984 + $0x8] sm:$0xf]
        %v988 = vld [vmem:[%s984 + $0xc] sm:$0xf]
        %v989 = vld [vmem:[%s984 + $0x10] sm:$0xf]
        %v990 = vld [vmem:[%s984 + $0x14] sm:$0xf]
        %v991 = vld [vmem:[%s984 + $0x18] sm:$0xf]
        %v992 = vld [vmem:[%s984 + $0x1c] sm:$0xf]
        %v993 = vld [vmem:[%s984 + $0x20] sm:$0xf]
        %v994 = vld [vmem:[%s984 + $0x24] sm:$0xf]
        %v995 = vld [vmem:[%s984 + $0x28] sm:$0xf]
        %v996 = vld [vmem:[%s984 + $0x2c] sm:$0xf]
        %v997 = vld [vmem:[%s984 + $0x30] sm:$0xf]
        %v998 = vld [vmem:[%s984 + $0x34] sm:$0xf]
        %v999 = vld [vmem:[%s984 + $0x38] sm:$0xf]
        %v1000 = vld [vmem:[%s984 + $0x3c] sm:$0xf]
        %v1001 = vld [vmem:[%s984 + $0x40] sm:$0xf]
        %v1002 = vld [vmem:[%s984 + $0x44] sm:$0xf]
        %v1003 = vld [vmem:[%s984 + $0x48] sm:$0xf]
        %v1004 = vld [vmem:[%s984 + $0x4c] sm:$0xf]
        %v1005 = vld [vmem:[%s984 + $0x50] sm:$0xf]
        %v1006 = vld [vmem:[%s984 + $0x54] sm:$0xf]
        %v1007 = vld [vmem:[%s984 + $0x58] sm:$0xf]
        %v1008 = vld [vmem:[%s984 + $0x5c] sm:$0xf]
        %v1033 = vunpack.c.l.b16 %v985
        %v1034 = vunpack.c.l.b16 %v986
        %v1035 = vunpack.c.l.b16 %v987
        %v1036 = vunpack.c.l.b16 %v988
        %v1037 = vunpack.c.l.b16 %v989
        %v1038 = vunpack.c.l.b16 %v990
        %v1039 = vunpack.c.l.b16 %v991
        %v1040 = vunpack.c.l.b16 %v992
        %v1041 = vunpack.c.l.b16 %v993
        %v1042 = vunpack.c.l.b16 %v994
        %v1043 = vunpack.c.l.b16 %v995
        %v1044 = vunpack.c.l.b16 %v996
        %v1045 = vunpack.c.l.b16 %v997
        %v1046 = vunpack.c.l.b16 %v998
        %v1047 = vunpack.c.l.b16 %v999
        %v1048 = vunpack.c.l.b16 %v1000
        %v1049 = vunpack.c.l.b16 %v1001
        %v1050 = vunpack.c.l.b16 %v1002
        %v1051 = vunpack.c.l.b16 %v1003
        %v1052 = vunpack.c.l.b16 %v1004
        %v1053 = vunpack.c.l.b16 %v1005
        %v1054 = vunpack.c.l.b16 %v1006
        %v1055 = vunpack.c.l.b16 %v1007
        %v1056 = vunpack.c.l.b16 %v1008
        %v1057 = vpack.c.b16 %v1034, %v1033
        %v1058 = vpack.c.b16 %v1036, %v1035
        %v1059 = vpack.c.b16 %v1038, %v1037
        %v1060 = vpack.c.b16 %v1040, %v1039
        %v1061 = vpack.c.b16 %v1042, %v1041
        %v1062 = vpack.c.b16 %v1044, %v1043
        %v1063 = vpack.c.b16 %v1046, %v1045
        %v1064 = vpack.c.b16 %v1048, %v1047
        %v1065 = vpack.c.b16 %v1050, %v1049
        %v1066 = vpack.c.b16 %v1052, %v1051
        %v1067 = vpack.c.b16 %v1054, %v1053
        %v1068 = vpack.c.b16 %v1056, %v1055
        %v1082 = vsel %vm897, %v890, 0
        %v1085 = vsel %vm897, %v891, 0
        %v1088 = vsel %vm897, %v892, 0
        %v1091 = vsel %vm897, %v893, 0
        %v1094 = vsel %vm897, %v894, 0
        %v1097 = vsel %vm897, %v895, 0
        %v1100 = vsel %vm897, %v896, 0
        %v1103 = vsel %vm897, %v950, 0
        %1105 = vmatprep.subr.bf16.mxu0 0
        %1106 = vmatpush1.bf16.msra.mxu0 %v1064
        %1107 = vmatprep.subr.bf16.mxu0 0
        %1108 = vmatpush1.bf16.msra.mxu0 %v1063
        %1109 = vmatprep.subr.bf16.mxu0 0
        %1110 = vmatpush1.bf16.msra.mxu0 %v1062
        %1111 = vmatprep.subr.bf16.mxu0 0
        %1112 = vmatpush1.bf16.msra.mxu0 %v1061
        %1113 = vmatprep.subr.bf16.mxu0 0
        %1114 = vmatpush1.bf16.msra.mxu0 %v1060
        %1115 = vmatprep.subr.bf16.mxu0 0
        %1116 = vmatpush1.bf16.msra.mxu0 %v1059
        %1117 = vmatprep.subr.bf16.mxu0 0
        %1118 = vmatpush1.bf16.msra.mxu0 %v1058
        %1119 = vmatprep.subr.bf16.mxu0 0
        %1120 = vmatpush1.bf16.msra.mxu0 %v1057
        %1121 = vmatprep.subr.bf16.mxu0 0
        %1122 = vmatpush2.bf16.msra.mxu0 0
        %1123 = vmatprep.subr.bf16.mxu0 0
        %1124 = vmatpush2.bf16.msra.mxu0 0
        %1125 = vmatprep.subr.bf16.mxu0 0
        %1126 = vmatpush2.bf16.msra.mxu0 0
        %1127 = vmatprep.subr.bf16.mxu0 0
        %1128 = vmatpush2.bf16.msra.mxu0 0
        %1129 = vmatprep.subr.bf16.mxu0 0
        %1130 = vmatpush2.bf16.msra.mxu0 %v1068
        %1131 = vmatprep.subr.bf16.mxu0 0
        %1132 = vmatpush2.bf16.msra.mxu0 %v1067
        %1133 = vmatprep.subr.bf16.mxu0 0
        %1134 = vmatpush2.bf16.msra.mxu0 %v1066
        %1135 = vmatprep.subr.bf16.mxu0 0
        %1136 = vmatpush2.bf16.msra.mxu0 %v1065
        %1137 = vmatprep.mubr.bf16.mxu0 %v1082
        %1138 = vmatmul.mubr.bf16.gmra.mxu0 %v904
        %v1139 = vpop.f32.mrf.mxu0
        %v1140 = vadd.f32 0.0, %v1139
        %v1141 = vpop.f32.mrf.mxu0
        %v1142 = vpop.f32.mrf.mxu0
        %v1143 = vadd.f32 0.0, %v1142
        %v1144 = vpop.f32.mrf.mxu0
        %1145 = vmatprep.mubr.bf16.mxu0 %v1085
        %1146 = vmatmul.mubr.bf16.gmra.mxu0 %v908
        %v1147 = vpop.f32.mrf.mxu0
        %v1148 = vadd.f32 0.0, %v1147
        %v1149 = vpop.f32.mrf.mxu0
        %v1150 = vpop.f32.mrf.mxu0
        %v1151 = vadd.f32 0.0, %v1150
        %v1152 = vpop.f32.mrf.mxu0
        %1153 = vmatprep.mubr.bf16.mxu0 %v1088
        %1154 = vmatmul.mubr.bf16.gmra.mxu0 %v912
        %v1155 = vpop.f32.mrf.mxu0
        %v1156 = vadd.f32 0.0, %v1155
        %v1157 = vpop.f32.mrf.mxu0
        %v1158 = vpop.f32.mrf.mxu0
        %v1159 = vadd.f32 0.0, %v1158
        %v1160 = vpop.f32.mrf.mxu0
        %1161 = vmatprep.mubr.bf16.mxu0 %v1091
        %1162 = vmatmul.mubr.bf16.gmra.mxu0 %v916
        %v1163 = vpop.f32.mrf.mxu0
        %v1164 = vadd.f32 0.0, %v1163
        %v1165 = vpop.f32.mrf.mxu0
        %v1166 = vpop.f32.mrf.mxu0
        %v1167 = vadd.f32 0.0, %v1166
        %v1168 = vpop.f32.mrf.mxu0
        %1169 = vmatprep.mubr.bf16.mxu0 %v1094
        %1170 = vmatmul.mubr.bf16.gmra.mxu0 %v920
        %v1171 = vpop.f32.mrf.mxu0
        %v1172 = vadd.f32 0.0, %v1171
        %v1173 = vpop.f32.mrf.mxu0
        %v1174 = vpop.f32.mrf.mxu0
        %v1175 = vadd.f32 0.0, %v1174
        %v1176 = vpop.f32.mrf.mxu0
        %1177 = vmatprep.mubr.bf16.mxu0 %v1097
        %1178 = vmatmul.mubr.bf16.gmra.mxu0 %v924
        %v1179 = vpop.f32.mrf.mxu0
        %v1180 = vadd.f32 0.0, %v1179
        %v1181 = vpop.f32.mrf.mxu0
        %v1182 = vpop.f32.mrf.mxu0
        %v1183 = vadd.f32 0.0, %v1182
        %v1184 = vpop.f32.mrf.mxu0
        %1185 = vmatprep.mubr.bf16.mxu0 %v1100
        %1186 = vmatmul.mubr.bf16.gmra.mxu0 %v928
        %v1187 = vpop.f32.mrf.mxu0
        %v1188 = vadd.f32 0.0, %v1187
        %v1189 = vpop.f32.mrf.mxu0
        %v1190 = vpop.f32.mrf.mxu0
        %v1191 = vadd.f32 0.0, %v1190
        %v1192 = vpop.f32.mrf.mxu0
        %1193 = vmatprep.mubr.bf16.mxu0 %v1103
        %1194 = vmatmul.mubr.bf16.gmra.mxu0 %v954
        %v1195 = vpop.f32.mrf.mxu0
        %v1196 = vadd.f32 0.0, %v1195
        %v1197 = vpop.f32.mrf.mxu0
        %v1198 = vpop.f32.mrf.mxu0
        %v1199 = vadd.f32 0.0, %v1198
        %v1200 = vpop.f32.mrf.mxu0
        %1201 = vdwg.mxu0
        %v1226 = vunpack.c.l.b16 %v960
        %v1227 = vunpack.c.l.b16 %v961
        %v1228 = vunpack.c.l.b16 %v962
        %v1229 = vunpack.c.l.b16 %v963
        %v1230 = vunpack.c.l.b16 %v964
        %v1231 = vunpack.c.l.b16 %v965
        %v1232 = vunpack.c.l.b16 %v966
        %v1233 = vunpack.c.l.b16 %v967
        %v1234 = vunpack.c.l.b16 %v968
        %v1235 = vunpack.c.l.b16 %v969
        %v1236 = vunpack.c.l.b16 %v970
        %v1237 = vunpack.c.l.b16 %v971
        %v1238 = vunpack.c.l.b16 %v972
        %v1239 = vunpack.c.l.b16 %v973
        %v1240 = vunpack.c.l.b16 %v974
        %v1241 = vunpack.c.l.b16 %v975
        %v1242 = vunpack.c.l.b16 %v976
        %v1243 = vunpack.c.l.b16 %v977
        %v1244 = vunpack.c.l.b16 %v978
        %v1245 = vunpack.c.l.b16 %v979
        %v1246 = vunpack.c.l.b16 %v980
        %v1247 = vunpack.c.l.b16 %v981
        %v1248 = vunpack.c.l.b16 %v982
        %v1249 = vunpack.c.l.b16 %v983
        %v1250 = vpack.c.b16 %v1227, %v1226
        %v1251 = vpack.c.b16 %v1229, %v1228
        %v1252 = vpack.c.b16 %v1231, %v1230
        %v1253 = vpack.c.b16 %v1233, %v1232
        %v1254 = vpack.c.b16 %v1235, %v1234
        %v1255 = vpack.c.b16 %v1237, %v1236
        %v1256 = vpack.c.b16 %v1239, %v1238
        %v1257 = vpack.c.b16 %v1241, %v1240
        %v1258 = vpack.c.b16 %v1243, %v1242
        %v1259 = vpack.c.b16 %v1245, %v1244
        %v1260 = vpack.c.b16 %v1247, %v1246
        %v1261 = vpack.c.b16 %v1249, %v1248
        %v1275 = vsel %vm897, %v889, 0
        %1277 = vmatprep.subr.bf16.mxu0 0
        %1278 = vmatpush1.bf16.msra.mxu0 %v1257
        %1279 = vmatprep.subr.bf16.mxu0 0
        %1280 = vmatpush1.bf16.msra.mxu0 %v1256
        %1281 = vmatprep.subr.bf16.mxu0 0
        %1282 = vmatpush1.bf16.msra.mxu0 %v1255
        %1283 = vmatprep.subr.bf16.mxu0 0
        %1284 = vmatpush1.bf16.msra.mxu0 %v1254
        %1285 = vmatprep.subr.bf16.mxu0 0
        %1286 = vmatpush1.bf16.msra.mxu0 %v1253
        %1287 = vmatprep.subr.bf16.mxu0 0
        %1288 = vmatpush1.bf16.msra.mxu0 %v1252
        %1289 = vmatprep.subr.bf16.mxu0 0
        %1290 = vmatpush1.bf16.msra.mxu0 %v1251
        %1291 = vmatprep.subr.bf16.mxu0 0
        %1292 = vmatpush1.bf16.msra.mxu0 %v1250
        %1293 = vmatprep.subr.bf16.mxu0 0
        %1294 = vmatpush2.bf16.msra.mxu0 0
        %1295 = vmatprep.subr.bf16.mxu0 0
        %1296 = vmatpush2.bf16.msra.mxu0 0
        %1297 = vmatprep.subr.bf16.mxu0 0
        %1298 = vmatpush2.bf16.msra.mxu0 0
        %1299 = vmatprep.subr.bf16.mxu0 0
        %1300 = vmatpush2.bf16.msra.mxu0 0
        %1301 = vmatprep.subr.bf16.mxu0 0
        %1302 = vmatpush2.bf16.msra.mxu0 %v1261
        %1303 = vmatprep.subr.bf16.mxu0 0
        %1304 = vmatpush2.bf16.msra.mxu0 %v1260
        %1305 = vmatprep.subr.bf16.mxu0 0
        %1306 = vmatpush2.bf16.msra.mxu0 %v1259
        %1307 = vmatprep.subr.bf16.mxu0 0
        %1308 = vmatpush2.bf16.msra.mxu0 %v1258
        %1309 = vmatprep.mubr.bf16.mxu0 %v1275
        %1310 = vmatmul.mubr.bf16.gmra.mxu0 %v900
        %v1311 = vpop.f32.mrf.mxu0
        %v1312 = vadd.f32 %v1140, %v1311
        %v1313 = vpop.f32.mrf.mxu0
        %v1314 = vpop.f32.mrf.mxu0
        %v1315 = vadd.f32 %v1143, %v1314
        %v1316 = vpop.f32.mrf.mxu0
        %1317 = vmatprep.mubr.bf16.mxu0 %v1082
        %1318 = vmatmul.mubr.bf16.gmra.mxu0 %v904
        %v1319 = vpop.f32.mrf.mxu0
        %v1320 = vadd.f32 %v1148, %v1319
        %v1321 = vpop.f32.mrf.mxu0
        %v1322 = vpop.f32.mrf.mxu0
        %v1323 = vadd.f32 %v1151, %v1322
        %v1324 = vpop.f32.mrf.mxu0
        %1325 = vmatprep.mubr.bf16.mxu0 %v1085
        %1326 = vmatmul.mubr.bf16.gmra.mxu0 %v908
        %v1327 = vpop.f32.mrf.mxu0
        %v1328 = vadd.f32 %v1156, %v1327
        %v1329 = vpop.f32.mrf.mxu0
        %v1330 = vpop.f32.mrf.mxu0
        %v1331 = vadd.f32 %v1159, %v1330
        %v1332 = vpop.f32.mrf.mxu0
        %1333 = vmatprep.mubr.bf16.mxu0 %v1088
        %1334 = vmatmul.mubr.bf16.gmra.mxu0 %v912
        %v1335 = vpop.f32.mrf.mxu0
        %v1336 = vadd.f32 %v1164, %v1335
        %v1337 = vpop.f32.mrf.mxu0
        %v1338 = vpop.f32.mrf.mxu0
        %v1339 = vadd.f32 %v1167, %v1338
        %v1340 = vpop.f32.mrf.mxu0
        %1341 = vmatprep.mubr.bf16.mxu0 %v1091
        %1342 = vmatmul.mubr.bf16.gmra.mxu0 %v916
        %v1343 = vpop.f32.mrf.mxu0
        %v1344 = vadd.f32 %v1172, %v1343
        %v1345 = vpop.f32.mrf.mxu0
        %v1346 = vpop.f32.mrf.mxu0
        %v1347 = vadd.f32 %v1175, %v1346
        %v1348 = vpop.f32.mrf.mxu0
        %1349 = vmatprep.mubr.bf16.mxu0 %v1094
        %1350 = vmatmul.mubr.bf16.gmra.mxu0 %v920
        %v1351 = vpop.f32.mrf.mxu0
        %v1352 = vadd.f32 %v1180, %v1351
        %v1353 = vpop.f32.mrf.mxu0
        %v1354 = vpop.f32.mrf.mxu0
        %v1355 = vadd.f32 %v1183, %v1354
        %v1356 = vpop.f32.mrf.mxu0
        %1357 = vmatprep.mubr.bf16.mxu0 %v1097
        %1358 = vmatmul.mubr.bf16.gmra.mxu0 %v924
        %v1359 = vpop.f32.mrf.mxu0
        %v1360 = vadd.f32 %v1188, %v1359
        %v1361 = vpop.f32.mrf.mxu0
        %v1362 = vpop.f32.mrf.mxu0
        %v1363 = vadd.f32 %v1191, %v1362
        %v1364 = vpop.f32.mrf.mxu0
        %1365 = vmatprep.mubr.bf16.mxu0 %v1100
        %1366 = vmatmul.mubr.bf16.gmra.mxu0 %v928
        %v1367 = vpop.f32.mrf.mxu0
        %v1368 = vadd.f32 %v1196, %v1367
        %v1369 = vpop.f32.mrf.mxu0
        %v1370 = vpop.f32.mrf.mxu0
        %v1371 = vadd.f32 %v1199, %v1370
        %v1372 = vpop.f32.mrf.mxu0
        %1373 = vdwg.mxu0
        %s1374 = scalar_lea.vmem [#allocation8], 192
        %v1375 = vld [vmem:[%s1374] sm:$0xf]
        %v1376 = vld [vmem:[%s1374 + $0x4] sm:$0xf]
        %v1377 = vld [vmem:[%s1374 + $0x8] sm:$0xf]
        %v1378 = vld [vmem:[%s1374 + $0xc] sm:$0xf]
        %v1379 = vld [vmem:[%s1374 + $0x10] sm:$0xf]
        %v1380 = vld [vmem:[%s1374 + $0x14] sm:$0xf]
        %v1381 = vld [vmem:[%s1374 + $0x18] sm:$0xf]
        %v1382 = vld [vmem:[%s1374 + $0x1c] sm:$0xf]
        %v1383 = vld [vmem:[%s1374 + $0x20] sm:$0xf]
        %v1384 = vld [vmem:[%s1374 + $0x24] sm:$0xf]
        %v1385 = vld [vmem:[%s1374 + $0x28] sm:$0xf]
        %v1386 = vld [vmem:[%s1374 + $0x2c] sm:$0xf]
        %v1387 = vld [vmem:[%s1374 + $0x30] sm:$0xf]
        %v1388 = vld [vmem:[%s1374 + $0x34] sm:$0xf]
        %v1389 = vld [vmem:[%s1374 + $0x38] sm:$0xf]
        %v1390 = vld [vmem:[%s1374 + $0x3c] sm:$0xf]
        %v1391 = vld [vmem:[%s1374 + $0x40] sm:$0xf]
        %v1392 = vld [vmem:[%s1374 + $0x44] sm:$0xf]
        %v1393 = vld [vmem:[%s1374 + $0x48] sm:$0xf]
        %v1394 = vld [vmem:[%s1374 + $0x4c] sm:$0xf]
        %v1395 = vld [vmem:[%s1374 + $0x50] sm:$0xf]
        %v1396 = vld [vmem:[%s1374 + $0x54] sm:$0xf]
        %v1397 = vld [vmem:[%s1374 + $0x58] sm:$0xf]
        %v1398 = vld [vmem:[%s1374 + $0x5c] sm:$0xf]
        %v1423 = vunpack.c.l.b16 %v1375
        %v1424 = vunpack.c.l.b16 %v1376
        %v1425 = vunpack.c.l.b16 %v1377
        %v1426 = vunpack.c.l.b16 %v1378
        %v1427 = vunpack.c.l.b16 %v1379
        %v1428 = vunpack.c.l.b16 %v1380
        %v1429 = vunpack.c.l.b16 %v1381
        %v1430 = vunpack.c.l.b16 %v1382
        %v1431 = vunpack.c.l.b16 %v1383
        %v1432 = vunpack.c.l.b16 %v1384
        %v1433 = vunpack.c.l.b16 %v1385
        %v1434 = vunpack.c.l.b16 %v1386
        %v1435 = vunpack.c.l.b16 %v1387
        %v1436 = vunpack.c.l.b16 %v1388
        %v1437 = vunpack.c.l.b16 %v1389
        %v1438 = vunpack.c.l.b16 %v1390
        %v1439 = vunpack.c.l.b16 %v1391
        %v1440 = vunpack.c.l.b16 %v1392
        %v1441 = vunpack.c.l.b16 %v1393
        %v1442 = vunpack.c.l.b16 %v1394
        %v1443 = vunpack.c.l.b16 %v1395
        %v1444 = vunpack.c.l.b16 %v1396
        %v1445 = vunpack.c.l.b16 %v1397
        %v1446 = vunpack.c.l.b16 %v1398
        %v1447 = vpack.c.b16 %v1424, %v1423
        %v1448 = vpack.c.b16 %v1426, %v1425
        %v1449 = vpack.c.b16 %v1428, %v1427
        %v1450 = vpack.c.b16 %v1430, %v1429
        %v1451 = vpack.c.b16 %v1432, %v1431
        %v1452 = vpack.c.b16 %v1434, %v1433
        %v1453 = vpack.c.b16 %v1436, %v1435
        %v1454 = vpack.c.b16 %v1438, %v1437
        %v1455 = vpack.c.b16 %v1440, %v1439
        %v1456 = vpack.c.b16 %v1442, %v1441
        %v1457 = vpack.c.b16 %v1444, %v1443
        %v1458 = vpack.c.b16 %v1446, %v1445
        %v1472 = vsel %vm897, %v951, 0
        %1474 = vmatprep.subr.bf16.mxu0 0
        %1475 = vmatpush1.bf16.msra.mxu0 %v1454
        %1476 = vmatprep.subr.bf16.mxu0 0
        %1477 = vmatpush1.bf16.msra.mxu0 %v1453
        %1478 = vmatprep.subr.bf16.mxu0 0
        %1479 = vmatpush1.bf16.msra.mxu0 %v1452
        %1480 = vmatprep.subr.bf16.mxu0 0
        %1481 = vmatpush1.bf16.msra.mxu0 %v1451
        %1482 = vmatprep.subr.bf16.mxu0 0
        %1483 = vmatpush1.bf16.msra.mxu0 %v1450
        %1484 = vmatprep.subr.bf16.mxu0 0
        %1485 = vmatpush1.bf16.msra.mxu0 %v1449
        %1486 = vmatprep.subr.bf16.mxu0 0
        %1487 = vmatpush1.bf16.msra.mxu0 %v1448
        %1488 = vmatprep.subr.bf16.mxu0 0
        %1489 = vmatpush1.bf16.msra.mxu0 %v1447
        %1490 = vmatprep.subr.bf16.mxu0 0
        %1491 = vmatpush2.bf16.msra.mxu0 0
        %1492 = vmatprep.subr.bf16.mxu0 0
        %1493 = vmatpush2.bf16.msra.mxu0 0
        %1494 = vmatprep.subr.bf16.mxu0 0
        %1495 = vmatpush2.bf16.msra.mxu0 0
        %1496 = vmatprep.subr.bf16.mxu0 0
        %1497 = vmatpush2.bf16.msra.mxu0 0
        %1498 = vmatprep.subr.bf16.mxu0 0
        %1499 = vmatpush2.bf16.msra.mxu0 %v1458
        %1500 = vmatprep.subr.bf16.mxu0 0
        %1501 = vmatpush2.bf16.msra.mxu0 %v1457
        %1502 = vmatprep.subr.bf16.mxu0 0
        %1503 = vmatpush2.bf16.msra.mxu0 %v1456
        %1504 = vmatprep.subr.bf16.mxu0 0
        %1505 = vmatpush2.bf16.msra.mxu0 %v1455
        %1506 = vmatprep.mubr.bf16.mxu0 %v1085
        %1507 = vmatmul.mubr.bf16.gmra.mxu0 %v908
        %v1508 = vpop.f32.mrf.mxu0
        %v1509 = vadd.f32 0.0, %v1508
        %v1510 = vpop.f32.mrf.mxu0
        %v1511 = vpop.f32.mrf.mxu0
        %v1512 = vadd.f32 0.0, %v1511
        %v1513 = vpop.f32.mrf.mxu0
        %1514 = vmatprep.mubr.bf16.mxu0 %v1088
        %1515 = vmatmul.mubr.bf16.gmra.mxu0 %v912
        %v1516 = vpop.f32.mrf.mxu0
        %v1517 = vadd.f32 0.0, %v1516
        %v1518 = vpop.f32.mrf.mxu0
        %v1519 = vpop.f32.mrf.mxu0
        %v1520 = vadd.f32 0.0, %v1519
        %v1521 = vpop.f32.mrf.mxu0
        %1522 = vmatprep.mubr.bf16.mxu0 %v1091
        %1523 = vmatmul.mubr.bf16.gmra.mxu0 %v916
        %v1524 = vpop.f32.mrf.mxu0
        %v1525 = vadd.f32 0.0, %v1524
        %v1526 = vpop.f32.mrf.mxu0
        %v1527 = vpop.f32.mrf.mxu0
        %v1528 = vadd.f32 0.0, %v1527
        %v1529 = vpop.f32.mrf.mxu0
        %1530 = vmatprep.mubr.bf16.mxu0 %v1094
        %1531 = vmatmul.mubr.bf16.gmra.mxu0 %v920
        %v1532 = vpop.f32.mrf.mxu0
        %v1533 = vadd.f32 0.0, %v1532
        %v1534 = vpop.f32.mrf.mxu0
        %v1535 = vpop.f32.mrf.mxu0
        %v1536 = vadd.f32 0.0, %v1535
        %v1537 = vpop.f32.mrf.mxu0
        %1538 = vmatprep.mubr.bf16.mxu0 %v1097
        %1539 = vmatmul.mubr.bf16.gmra.mxu0 %v924
        %v1540 = vpop.f32.mrf.mxu0
        %v1541 = vadd.f32 0.0, %v1540
        %v1542 = vpop.f32.mrf.mxu0
        %v1543 = vpop.f32.mrf.mxu0
        %v1544 = vadd.f32 0.0, %v1543
        %v1545 = vpop.f32.mrf.mxu0
        %1546 = vmatprep.mubr.bf16.mxu0 %v1100
        %1547 = vmatmul.mubr.bf16.gmra.mxu0 %v928
        %v1548 = vpop.f32.mrf.mxu0
        %v1549 = vadd.f32 0.0, %v1548
        %v1550 = vpop.f32.mrf.mxu0
        %v1551 = vpop.f32.mrf.mxu0
        %v1552 = vadd.f32 0.0, %v1551
        %v1553 = vpop.f32.mrf.mxu0
        %1554 = vmatprep.mubr.bf16.mxu0 %v1103
        %1555 = vmatmul.mubr.bf16.gmra.mxu0 %v954
        %v1556 = vpop.f32.mrf.mxu0
        %v1557 = vadd.f32 0.0, %v1556
        %v1558 = vpop.f32.mrf.mxu0
        %v1559 = vpop.f32.mrf.mxu0
        %v1560 = vadd.f32 0.0, %v1559
        %v1561 = vpop.f32.mrf.mxu0
        %1562 = vmatprep.mubr.bf16.mxu0 %v1472
        %1563 = vmatmul.mubr.bf16.gmra.mxu0 %v958
        %v1564 = vpop.f32.mrf.mxu0
        %v1565 = vadd.f32 0.0, %v1564
        %v1566 = vpop.f32.mrf.mxu0
        %v1567 = vpop.f32.mrf.mxu0
        %v1568 = vadd.f32 0.0, %v1567
        %v1569 = vpop.f32.mrf.mxu0
        %1570 = vdwg.mxu0
        %v1571 = vadd.f32 %v1312, %v1509
        %v1572 = vadd.f32 %v1315, %v1512
        %v1573 = vadd.f32 %v1320, %v1517
        %v1574 = vadd.f32 %v1323, %v1520
        %v1575 = vadd.f32 %v1328, %v1525
        %v1576 = vadd.f32 %v1331, %v1528
        %v1577 = vadd.f32 %v1336, %v1533
        %v1578 = vadd.f32 %v1339, %v1536
        %v1579 = vadd.f32 %v1344, %v1541
        %v1580 = vadd.f32 %v1347, %v1544
        %v1581 = vadd.f32 %v1352, %v1549
        %v1582 = vadd.f32 %v1355, %v1552
        %v1583 = vadd.f32 %v1360, %v1557
        %v1584 = vadd.f32 %v1363, %v1560
        %v1585 = vadd.f32 %v1368, %v1565
        %v1586 = vadd.f32 %v1371, %v1568
        %v1587 = vld [vmem:[%s4] sm:$0x1]
        %v1589 = vlaneseq
        %v1590 = vshrl.u32 %v1589, 7
        %v1591 = vsub.s32 0, %v1590
        %v1592 = vrot.slane %v1587, %v1591
        %v1594 = vadd.f32 %v1571, %v1592
        %v1595 = vadd.f32 %v1572, %v1592
        %v1596 = vadd.f32 %v1573, %v1592
        %v1597 = vadd.f32 %v1574, %v1592
        %v1598 = vadd.f32 %v1575, %v1592
        %v1599 = vadd.f32 %v1576, %v1592
        %v1600 = vadd.f32 %v1577, %v1592
        %v1601 = vadd.f32 %v1578, %v1592
        %v1602 = vadd.f32 %v1579, %v1592
        %v1603 = vadd.f32 %v1580, %v1592
        %v1604 = vadd.f32 %v1581, %v1592
        %v1605 = vadd.f32 %v1582, %v1592
        %v1606 = vadd.f32 %v1583, %v1592
        %v1607 = vadd.f32 %v1584, %v1592
        %v1608 = vadd.f32 %v1585, %v1592
        %v1609 = vadd.f32 %v1586, %v1592
        %v1610 = vmax.f32 %v1594, 0.0
        %v1611 = vmax.f32 %v1595, 0.0
        %v1612 = vmax.f32 %v1596, 0.0
        %v1613 = vmax.f32 %v1597, 0.0
        %v1614 = vmax.f32 %v1598, 0.0
        %v1615 = vmax.f32 %v1599, 0.0
        %v1616 = vmax.f32 %v1600, 0.0
        %v1617 = vmax.f32 %v1601, 0.0
        %v1618 = vmax.f32 %v1602, 0.0
        %v1619 = vmax.f32 %v1603, 0.0
        %v1620 = vmax.f32 %v1604, 0.0
        %v1621 = vmax.f32 %v1605, 0.0
        %v1622 = vmax.f32 %v1606, 0.0
        %v1623 = vmax.f32 %v1607, 0.0
        %v1624 = vmax.f32 %v1608, 0.0
        %v1625 = vmax.f32 %v1609, 0.0
        %v1626 = vpack.c.bf16 %v1611, %v1610
        %v1627 = vpack.c.bf16 %v1613, %v1612
        %v1628 = vpack.c.bf16 %v1615, %v1614
        %v1629 = vpack.c.bf16 %v1617, %v1616
        %v1630 = vpack.c.bf16 %v1619, %v1618
        %v1631 = vpack.c.bf16 %v1621, %v1620
        %v1632 = vpack.c.bf16 %v1623, %v1622
        %v1633 = vpack.c.bf16 %v1625, %v1624
        %v1642 = vunpack.c.l.b16 %v1626
        %v1643 = vunpack.c.h.b16 %v1626
        %v1644 = vunpack.c.l.b16 %v1627
        %v1645 = vunpack.c.h.b16 %v1627
        %v1646 = vunpack.c.l.b16 %v1628
        %v1647 = vunpack.c.h.b16 %v1628
        %v1648 = vunpack.c.l.b16 %v1629
        %v1649 = vunpack.c.h.b16 %v1629
        %v1650 = vunpack.c.l.b16 %v1630
        %v1651 = vunpack.c.h.b16 %v1630
        %v1652 = vunpack.c.l.b16 %v1631
        %v1653 = vunpack.c.h.b16 %v1631
        %v1654 = vunpack.c.l.b16 %v1632
        %v1655 = vunpack.c.h.b16 %v1632
        %v1656 = vunpack.c.l.b16 %v1633
        %v1657 = vunpack.c.h.b16 %v1633
        %v1658 = vpack.c.b16 %v1642, %v1642
        %v1659 = vpack.c.b16 %v1643, %v1643
        %v1660 = vpack.c.b16 %v1644, %v1644
        %v1661 = vpack.c.b16 %v1645, %v1645
        %v1662 = vpack.c.b16 %v1646, %v1646
        %v1663 = vpack.c.b16 %v1647, %v1647
        %v1664 = vpack.c.b16 %v1648, %v1648
        %v1665 = vpack.c.b16 %v1649, %v1649
        %v1666 = vpack.c.b16 %v1650, %v1650
        %v1667 = vpack.c.b16 %v1651, %v1651
        %v1668 = vpack.c.b16 %v1652, %v1652
        %v1669 = vpack.c.b16 %v1653, %v1653
        %v1670 = vpack.c.b16 %v1654, %v1654
        %v1671 = vpack.c.b16 %v1655, %v1655
        %v1672 = vpack.c.b16 %v1656, %v1656
        %v1673 = vpack.c.b16 %v1657, %v1657
        %1690 = vst [vmem:[%s414] sm:$0xf] %v1658
        %1691 = vst [vmem:[%s414 + $0x4] sm:$0xf] %v1659
        %1692 = vst [vmem:[%s414 + $0x8] sm:$0xf] %v1660
        %1693 = vst [vmem:[%s414 + $0xc] sm:$0xf] %v1661
        %1694 = vst [vmem:[%s414 + $0x10] sm:$0xf] %v1662
        %1695 = vst [vmem:[%s414 + $0x14] sm:$0xf] %v1663
        %1696 = vst [vmem:[%s414 + $0x18] sm:$0xf] %v1664
        %1697 = vst [vmem:[%s414 + $0x1c] sm:$0xf] %v1665
        %1698 = vst [vmem:[%s414 + $0x20] sm:$0xf] %v1666
        %1699 = vst [vmem:[%s414 + $0x24] sm:$0xf] %v1667
        %1700 = vst [vmem:[%s414 + $0x28] sm:$0xf] %v1668
        %1701 = vst [vmem:[%s414 + $0x2c] sm:$0xf] %v1669
        %1702 = vst [vmem:[%s414 + $0x30] sm:$0xf] %v1670
        %1703 = vst [vmem:[%s414 + $0x34] sm:$0xf] %v1671
        %1704 = vst [vmem:[%s414 + $0x38] sm:$0xf] %v1672
        %1705 = vst [vmem:[%s414 + $0x3c] sm:$0xf] %v1673
        %v1706 = vmax.f32 %v1610, %v1612
        %v1707 = vmax.f32 %v1611, %v1613
        %v1708 = vmax.f32 %v1614, %v1616
        %v1709 = vmax.f32 %v1615, %v1617
        %v1710 = vmax.f32 %v1618, %v1620
        %v1711 = vmax.f32 %v1619, %v1621
        %v1712 = vmax.f32 %v1622, %v1624
        %v1713 = vmax.f32 %v1623, %v1625
        %v1722 = vcombine.high %v1706, %v1706
        %v1724 = vunpack.c.l.s4 1983009808
        %v1725 = vunpack.c.0.s8 %v1724
        %v1726 = vlaneseq
        %v1727 = vshrl.u32 %v1726, 7
        %v1728 = vsub.s32 %v1725, %v1727
        %v1729 = vrot.slane %v1706, %v1728
        %v1731 = vunpack.c.l.s4 1983009808
        %v1732 = vunpack.c.0.s8 %v1731
        %v1733 = vlaneseq
        %v1734 = vshrl.u32 %v1733, 7
        %v1735 = vsub.s32 %v1732, %v1734
        %v1736 = vrot.slane %v1722, %v1735
        %v1737 = vcombine.high %v1729, %v1729
        %v1738 = vcombine.high %v1736, %v1736
        %v1739 = vcombine.high %v1707, %v1707
        %v1741 = vunpack.c.l.s4 1983009808
        %v1742 = vunpack.c.0.s8 %v1741
        %v1743 = vlaneseq
        %v1744 = vshrl.u32 %v1743, 7
        %v1745 = vsub.s32 %v1742, %v1744
        %v1746 = vrot.slane %v1707, %v1745
        %v1748 = vunpack.c.l.s4 1983009808
        %v1749 = vunpack.c.0.s8 %v1748
        %v1750 = vlaneseq
        %v1751 = vshrl.u32 %v1750, 7
        %v1752 = vsub.s32 %v1749, %v1751
        %v1753 = vrot.slane %v1739, %v1752
        %v1754 = vcombine.high %v1746, %v1746
        %v1755 = vcombine.high %v1753, %v1753
        %v1756 = vcombine.high %v1708, %v1708
        %v1758 = vunpack.c.l.s4 1983009808
        %v1759 = vunpack.c.0.s8 %v1758
        %v1760 = vlaneseq
        %v1761 = vshrl.u32 %v1760, 7
        %v1762 = vsub.s32 %v1759, %v1761
        %v1763 = vrot.slane %v1708, %v1762
        %v1765 = vunpack.c.l.s4 1983009808
        %v1766 = vunpack.c.0.s8 %v1765
        %v1767 = vlaneseq
        %v1768 = vshrl.u32 %v1767, 7
        %v1769 = vsub.s32 %v1766, %v1768
        %v1770 = vrot.slane %v1756, %v1769
        %v1771 = vcombine.high %v1763, %v1763
        %v1772 = vcombine.high %v1770, %v1770
        %v1773 = vcombine.high %v1709, %v1709
        %v1775 = vunpack.c.l.s4 1983009808
        %v1776 = vunpack.c.0.s8 %v1775
        %v1777 = vlaneseq
        %v1778 = vshrl.u32 %v1777, 7
        %v1779 = vsub.s32 %v1776, %v1778
        %v1780 = vrot.slane %v1709, %v1779
        %v1782 = vunpack.c.l.s4 1983009808
        %v1783 = vunpack.c.0.s8 %v1782
        %v1784 = vlaneseq
        %v1785 = vshrl.u32 %v1784, 7
        %v1786 = vsub.s32 %v1783, %v1785
        %v1787 = vrot.slane %v1773, %v1786
        %v1788 = vcombine.high %v1780, %v1780
        %v1789 = vcombine.high %v1787, %v1787
        %v1790 = vcombine.high %v1710, %v1710
        %v1792 = vunpack.c.l.s4 1983009808
        %v1793 = vunpack.c.0.s8 %v1792
        %v1794 = vlaneseq
        %v1795 = vshrl.u32 %v1794, 7
        %v1796 = vsub.s32 %v1793, %v1795
        %v1797 = vrot.slane %v1710, %v1796
        %v1799 = vunpack.c.l.s4 1983009808
        %v1800 = vunpack.c.0.s8 %v1799
        %v1801 = vlaneseq
        %v1802 = vshrl.u32 %v1801, 7
        %v1803 = vsub.s32 %v1800, %v1802
        %v1804 = vrot.slane %v1790, %v1803
        %v1805 = vcombine.high %v1797, %v1797
        %v1806 = vcombine.high %v1804, %v1804
        %v1807 = vcombine.high %v1711, %v1711
        %v1809 = vunpack.c.l.s4 1983009808
        %v1810 = vunpack.c.0.s8 %v1809
        %v1811 = vlaneseq
        %v1812 = vshrl.u32 %v1811, 7
        %v1813 = vsub.s32 %v1810, %v1812
        %v1814 = vrot.slane %v1711, %v1813
        %v1816 = vunpack.c.l.s4 1983009808
        %v1817 = vunpack.c.0.s8 %v1816
        %v1818 = vlaneseq
        %v1819 = vshrl.u32 %v1818, 7
        %v1820 = vsub.s32 %v1817, %v1819
        %v1821 = vrot.slane %v1807, %v1820
        %v1822 = vcombine.high %v1814, %v1814
        %v1823 = vcombine.high %v1821, %v1821
        %v1824 = vcombine.high %v1712, %v1712
        %v1826 = vunpack.c.l.s4 1983009808
        %v1827 = vunpack.c.0.s8 %v1826
        %v1828 = vlaneseq
        %v1829 = vshrl.u32 %v1828, 7
        %v1830 = vsub.s32 %v1827, %v1829
        %v1831 = vrot.slane %v1712, %v1830
        %v1833 = vunpack.c.l.s4 1983009808
        %v1834 = vunpack.c.0.s8 %v1833
        %v1835 = vlaneseq
        %v1836 = vshrl.u32 %v1835, 7
        %v1837 = vsub.s32 %v1834, %v1836
        %v1838 = vrot.slane %v1824, %v1837
        %v1839 = vcombine.high %v1831, %v1831
        %v1840 = vcombine.high %v1838, %v1838
        %v1841 = vcombine.high %v1713, %v1713
        %v1843 = vunpack.c.l.s4 1983009808
        %v1844 = vunpack.c.0.s8 %v1843
        %v1845 = vlaneseq
        %v1846 = vshrl.u32 %v1845, 7
        %v1847 = vsub.s32 %v1844, %v1846
        %v1848 = vrot.slane %v1713, %v1847
        %v1850 = vunpack.c.l.s4 1983009808
        %v1851 = vunpack.c.0.s8 %v1850
        %v1852 = vlaneseq
        %v1853 = vshrl.u32 %v1852, 7
        %v1854 = vsub.s32 %v1851, %v1853
        %v1855 = vrot.slane %v1841, %v1854
        %v1856 = vcombine.high %v1848, %v1848
        %v1857 = vcombine.high %v1855, %v1855
        %vm1890 = vcmask 1041408
        %v1891 = vsel %vm1890, %v1729, -inf
        %v1892 = vrot.slane %v1891, 4
        %v1893 = vmax.f32 %v1891, %v1892
        %v1894 = vrot.slane %v1893, 2
        %v1895 = vmax.f32 %v1893, %v1894
        %v1896 = vrot.slane %v1895, 1
        %v1897 = vmax.f32 %v1895, %v1896
        %v1898 = vsel %vm1890, %v1737, -inf
        %v1899 = vrot.slane %v1898, 4
        %v1900 = vmax.f32 %v1898, %v1899
        %v1901 = vrot.slane %v1900, 2
        %v1902 = vmax.f32 %v1900, %v1901
        %v1903 = vrot.slane %v1902, 1
        %v1904 = vmax.f32 %v1902, %v1903
        %v1905 = vsel %vm1890, %v1736, -inf
        %v1906 = vrot.slane %v1905, 4
        %v1907 = vmax.f32 %v1905, %v1906
        %v1908 = vrot.slane %v1907, 2
        %v1909 = vmax.f32 %v1907, %v1908
        %v1910 = vrot.slane %v1909, 1
        %v1911 = vmax.f32 %v1909, %v1910
        %v1912 = vsel %vm1890, %v1738, -inf
        %v1913 = vrot.slane %v1912, 4
        %v1914 = vmax.f32 %v1912, %v1913
        %v1915 = vrot.slane %v1914, 2
        %v1916 = vmax.f32 %v1914, %v1915
        %v1917 = vrot.slane %v1916, 1
        %v1918 = vmax.f32 %v1916, %v1917
        %v1919 = vsel %vm1890, %v1746, -inf
        %v1920 = vrot.slane %v1919, 4
        %v1921 = vmax.f32 %v1919, %v1920
        %v1922 = vrot.slane %v1921, 2
        %v1923 = vmax.f32 %v1921, %v1922
        %v1924 = vrot.slane %v1923, 1
        %v1925 = vmax.f32 %v1923, %v1924
        %v1926 = vsel %vm1890, %v1754, -inf
        %v1927 = vrot.slane %v1926, 4
        %v1928 = vmax.f32 %v1926, %v1927
        %v1929 = vrot.slane %v1928, 2
        %v1930 = vmax.f32 %v1928, %v1929
        %v1931 = vrot.slane %v1930, 1
        %v1932 = vmax.f32 %v1930, %v1931
        %v1933 = vsel %vm1890, %v1753, -inf
        %v1934 = vrot.slane %v1933, 4
        %v1935 = vmax.f32 %v1933, %v1934
        %v1936 = vrot.slane %v1935, 2
        %v1937 = vmax.f32 %v1935, %v1936
        %v1938 = vrot.slane %v1937, 1
        %v1939 = vmax.f32 %v1937, %v1938
        %v1940 = vsel %vm1890, %v1755, -inf
        %v1941 = vrot.slane %v1940, 4
        %v1942 = vmax.f32 %v1940, %v1941
        %v1943 = vrot.slane %v1942, 2
        %v1944 = vmax.f32 %v1942, %v1943
        %v1945 = vrot.slane %v1944, 1
        %v1946 = vmax.f32 %v1944, %v1945
        %v1947 = vsel %vm1890, %v1763, -inf
        %v1948 = vrot.slane %v1947, 4
        %v1949 = vmax.f32 %v1947, %v1948
        %v1950 = vrot.slane %v1949, 2
        %v1951 = vmax.f32 %v1949, %v1950
        %v1952 = vrot.slane %v1951, 1
        %v1953 = vmax.f32 %v1951, %v1952
        %v1954 = vsel %vm1890, %v1771, -inf
        %v1955 = vrot.slane %v1954, 4
        %v1956 = vmax.f32 %v1954, %v1955
        %v1957 = vrot.slane %v1956, 2
        %v1958 = vmax.f32 %v1956, %v1957
        %v1959 = vrot.slane %v1958, 1
        %v1960 = vmax.f32 %v1958, %v1959
        %v1961 = vsel %vm1890, %v1770, -inf
        %v1962 = vrot.slane %v1961, 4
        %v1963 = vmax.f32 %v1961, %v1962
        %v1964 = vrot.slane %v1963, 2
        %v1965 = vmax.f32 %v1963, %v1964
        %v1966 = vrot.slane %v1965, 1
        %v1967 = vmax.f32 %v1965, %v1966
        %v1968 = vsel %vm1890, %v1772, -inf
        %v1969 = vrot.slane %v1968, 4
        %v1970 = vmax.f32 %v1968, %v1969
        %v1971 = vrot.slane %v1970, 2
        %v1972 = vmax.f32 %v1970, %v1971
        %v1973 = vrot.slane %v1972, 1
        %v1974 = vmax.f32 %v1972, %v1973
        %v1975 = vsel %vm1890, %v1780, -inf
        %v1976 = vrot.slane %v1975, 4
        %v1977 = vmax.f32 %v1975, %v1976
        %v1978 = vrot.slane %v1977, 2
        %v1979 = vmax.f32 %v1977, %v1978
        %v1980 = vrot.slane %v1979, 1
        %v1981 = vmax.f32 %v1979, %v1980
        %v1982 = vsel %vm1890, %v1788, -inf
        %v1983 = vrot.slane %v1982, 4
        %v1984 = vmax.f32 %v1982, %v1983
        %v1985 = vrot.slane %v1984, 2
        %v1986 = vmax.f32 %v1984, %v1985
        %v1987 = vrot.slane %v1986, 1
        %v1988 = vmax.f32 %v1986, %v1987
        %v1989 = vsel %vm1890, %v1787, -inf
        %v1990 = vrot.slane %v1989, 4
        %v1991 = vmax.f32 %v1989, %v1990
        %v1992 = vrot.slane %v1991, 2
        %v1993 = vmax.f32 %v1991, %v1992
        %v1994 = vrot.slane %v1993, 1
        %v1995 = vmax.f32 %v1993, %v1994
        %v1996 = vsel %vm1890, %v1789, -inf
        %v1997 = vrot.slane %v1996, 4
        %v1998 = vmax.f32 %v1996, %v1997
        %v1999 = vrot.slane %v1998, 2
        %v2000 = vmax.f32 %v1998, %v1999
        %v2001 = vrot.slane %v2000, 1
        %v2002 = vmax.f32 %v2000, %v2001
        %v2003 = vsel %vm1890, %v1797, -inf
        %v2004 = vrot.slane %v2003, 4
        %v2005 = vmax.f32 %v2003, %v2004
        %v2006 = vrot.slane %v2005, 2
        %v2007 = vmax.f32 %v2005, %v2006
        %v2008 = vrot.slane %v2007, 1
        %v2009 = vmax.f32 %v2007, %v2008
        %v2010 = vsel %vm1890, %v1805, -inf
        %v2011 = vrot.slane %v2010, 4
        %v2012 = vmax.f32 %v2010, %v2011
        %v2013 = vrot.slane %v2012, 2
        %v2014 = vmax.f32 %v2012, %v2013
        %v2015 = vrot.slane %v2014, 1
        %v2016 = vmax.f32 %v2014, %v2015
        %v2017 = vsel %vm1890, %v1804, -inf
        %v2018 = vrot.slane %v2017, 4
        %v2019 = vmax.f32 %v2017, %v2018
        %v2020 = vrot.slane %v2019, 2
        %v2021 = vmax.f32 %v2019, %v2020
        %v2022 = vrot.slane %v2021, 1
        %v2023 = vmax.f32 %v2021, %v2022
        %v2024 = vsel %vm1890, %v1806, -inf
        %v2025 = vrot.slane %v2024, 4
        %v2026 = vmax.f32 %v2024, %v2025
        %v2027 = vrot.slane %v2026, 2
        %v2028 = vmax.f32 %v2026, %v2027
        %v2029 = vrot.slane %v2028, 1
        %v2030 = vmax.f32 %v2028, %v2029
        %v2031 = vsel %vm1890, %v1814, -inf
        %v2032 = vrot.slane %v2031, 4
        %v2033 = vmax.f32 %v2031, %v2032
        %v2034 = vrot.slane %v2033, 2
        %v2035 = vmax.f32 %v2033, %v2034
        %v2036 = vrot.slane %v2035, 1
        %v2037 = vmax.f32 %v2035, %v2036
        %v2038 = vsel %vm1890, %v1822, -inf
        %v2039 = vrot.slane %v2038, 4
        %v2040 = vmax.f32 %v2038, %v2039
        %v2041 = vrot.slane %v2040, 2
        %v2042 = vmax.f32 %v2040, %v2041
        %v2043 = vrot.slane %v2042, 1
        %v2044 = vmax.f32 %v2042, %v2043
        %v2045 = vsel %vm1890, %v1821, -inf
        %v2046 = vrot.slane %v2045, 4
        %v2047 = vmax.f32 %v2045, %v2046
        %v2048 = vrot.slane %v2047, 2
        %v2049 = vmax.f32 %v2047, %v2048
        %v2050 = vrot.slane %v2049, 1
        %v2051 = vmax.f32 %v2049, %v2050
        %v2052 = vsel %vm1890, %v1823, -inf
        %v2053 = vrot.slane %v2052, 4
        %v2054 = vmax.f32 %v2052, %v2053
        %v2055 = vrot.slane %v2054, 2
        %v2056 = vmax.f32 %v2054, %v2055
        %v2057 = vrot.slane %v2056, 1
        %v2058 = vmax.f32 %v2056, %v2057
        %v2059 = vsel %vm1890, %v1831, -inf
        %v2060 = vrot.slane %v2059, 4
        %v2061 = vmax.f32 %v2059, %v2060
        %v2062 = vrot.slane %v2061, 2
        %v2063 = vmax.f32 %v2061, %v2062
        %v2064 = vrot.slane %v2063, 1
        %v2065 = vmax.f32 %v2063, %v2064
        %v2066 = vsel %vm1890, %v1839, -inf
        %v2067 = vrot.slane %v2066, 4
        %v2068 = vmax.f32 %v2066, %v2067
        %v2069 = vrot.slane %v2068, 2
        %v2070 = vmax.f32 %v2068, %v2069
        %v2071 = vrot.slane %v2070, 1
        %v2072 = vmax.f32 %v2070, %v2071
        %v2073 = vsel %vm1890, %v1838, -inf
        %v2074 = vrot.slane %v2073, 4
        %v2075 = vmax.f32 %v2073, %v2074
        %v2076 = vrot.slane %v2075, 2
        %v2077 = vmax.f32 %v2075, %v2076
        %v2078 = vrot.slane %v2077, 1
        %v2079 = vmax.f32 %v2077, %v2078
        %v2080 = vsel %vm1890, %v1840, -inf
        %v2081 = vrot.slane %v2080, 4
        %v2082 = vmax.f32 %v2080, %v2081
        %v2083 = vrot.slane %v2082, 2
        %v2084 = vmax.f32 %v2082, %v2083
        %v2085 = vrot.slane %v2084, 1
        %v2086 = vmax.f32 %v2084, %v2085
        %v2087 = vsel %vm1890, %v1848, -inf
        %v2088 = vrot.slane %v2087, 4
        %v2089 = vmax.f32 %v2087, %v2088
        %v2090 = vrot.slane %v2089, 2
        %v2091 = vmax.f32 %v2089, %v2090
        %v2092 = vrot.slane %v2091, 1
        %v2093 = vmax.f32 %v2091, %v2092
        %v2094 = vsel %vm1890, %v1856, -inf
        %v2095 = vrot.slane %v2094, 4
        %v2096 = vmax.f32 %v2094, %v2095
        %v2097 = vrot.slane %v2096, 2
        %v2098 = vmax.f32 %v2096, %v2097
        %v2099 = vrot.slane %v2098, 1
        %v2100 = vmax.f32 %v2098, %v2099
        %v2101 = vsel %vm1890, %v1855, -inf
        %v2102 = vrot.slane %v2101, 4
        %v2103 = vmax.f32 %v2101, %v2102
        %v2104 = vrot.slane %v2103, 2
        %v2105 = vmax.f32 %v2103, %v2104
        %v2106 = vrot.slane %v2105, 1
        %v2107 = vmax.f32 %v2105, %v2106
        %v2108 = vsel %vm1890, %v1857, -inf
        %v2109 = vrot.slane %v2108, 4
        %v2110 = vmax.f32 %v2108, %v2109
        %v2111 = vrot.slane %v2110, 2
        %v2112 = vmax.f32 %v2110, %v2111
        %v2113 = vrot.slane %v2112, 1
        %v2114 = vmax.f32 %v2112, %v2113
        %v2115 = vpack.c.bf16 %v1897, %v1897
        %v2116 = vpack.c.bf16 %v1904, %v1904
        %v2117 = vpack.c.bf16 %v1911, %v1911
        %v2118 = vpack.c.bf16 %v1918, %v1918
        %v2119 = vpack.c.bf16 %v1925, %v1925
        %v2120 = vpack.c.bf16 %v1932, %v1932
        %v2121 = vpack.c.bf16 %v1939, %v1939
        %v2122 = vpack.c.bf16 %v1946, %v1946
        %v2123 = vpack.c.bf16 %v1953, %v1953
        %v2124 = vpack.c.bf16 %v1960, %v1960
        %v2125 = vpack.c.bf16 %v1967, %v1967
        %v2126 = vpack.c.bf16 %v1974, %v1974
        %v2127 = vpack.c.bf16 %v1981, %v1981
        %v2128 = vpack.c.bf16 %v1988, %v1988
        %v2129 = vpack.c.bf16 %v1995, %v1995
        %v2130 = vpack.c.bf16 %v2002, %v2002
        %v2131 = vpack.c.bf16 %v2009, %v2009
        %v2132 = vpack.c.bf16 %v2016, %v2016
        %v2133 = vpack.c.bf16 %v2023, %v2023
        %v2134 = vpack.c.bf16 %v2030, %v2030
        %v2135 = vpack.c.bf16 %v2037, %v2037
        %v2136 = vpack.c.bf16 %v2044, %v2044
        %v2137 = vpack.c.bf16 %v2051, %v2051
        %v2138 = vpack.c.bf16 %v2058, %v2058
        %v2139 = vpack.c.bf16 %v2065, %v2065
        %v2140 = vpack.c.bf16 %v2072, %v2072
        %v2141 = vpack.c.bf16 %v2079, %v2079
        %v2142 = vpack.c.bf16 %v2086, %v2086
        %v2143 = vpack.c.bf16 %v2093, %v2093
        %v2144 = vpack.c.bf16 %v2100, %v2100
        %v2145 = vpack.c.bf16 %v2107, %v2107
        %v2146 = vpack.c.bf16 %v2114, %v2114
        %v2179 = vunpack.c.l.b16 %v2115
        %v2180 = vunpack.c.l.b16 %v2116
        %v2181 = vunpack.c.l.b16 %v2117
        %v2182 = vunpack.c.l.b16 %v2118
        %v2183 = vunpack.c.l.b16 %v2119
        %v2184 = vunpack.c.l.b16 %v2120
        %v2185 = vunpack.c.l.b16 %v2121
        %v2186 = vunpack.c.l.b16 %v2122
        %v2187 = vunpack.c.l.b16 %v2123
        %v2188 = vunpack.c.l.b16 %v2124
        %v2189 = vunpack.c.l.b16 %v2125
        %v2190 = vunpack.c.l.b16 %v2126
        %v2191 = vunpack.c.l.b16 %v2127
        %v2192 = vunpack.c.l.b16 %v2128
        %v2193 = vunpack.c.l.b16 %v2129
        %v2194 = vunpack.c.l.b16 %v2130
        %v2195 = vunpack.c.l.b16 %v2131
        %v2196 = vunpack.c.l.b16 %v2132
        %v2197 = vunpack.c.l.b16 %v2133
        %v2198 = vunpack.c.l.b16 %v2134
        %v2199 = vunpack.c.l.b16 %v2135
        %v2200 = vunpack.c.l.b16 %v2136
        %v2201 = vunpack.c.l.b16 %v2137
        %v2202 = vunpack.c.l.b16 %v2138
        %v2203 = vunpack.c.l.b16 %v2139
        %v2204 = vunpack.c.l.b16 %v2140
        %v2205 = vunpack.c.l.b16 %v2141
        %v2206 = vunpack.c.l.b16 %v2142
        %v2207 = vunpack.c.l.b16 %v2143
        %v2208 = vunpack.c.l.b16 %v2144
        %v2209 = vunpack.c.l.b16 %v2145
        %v2210 = vunpack.c.l.b16 %v2146
        %v2211 = vpack.c.b16 %v2179, %v2179
        %v2212 = vpack.c.b16 %v2180, %v2180
        %v2213 = vpack.c.b16 %v2181, %v2181
        %v2214 = vpack.c.b16 %v2182, %v2182
        %v2215 = vpack.c.b16 %v2183, %v2183
        %v2216 = vpack.c.b16 %v2184, %v2184
        %v2217 = vpack.c.b16 %v2185, %v2185
        %v2218 = vpack.c.b16 %v2186, %v2186
        %v2219 = vpack.c.b16 %v2187, %v2187
        %v2220 = vpack.c.b16 %v2188, %v2188
        %v2221 = vpack.c.b16 %v2189, %v2189
        %v2222 = vpack.c.b16 %v2190, %v2190
        %v2223 = vpack.c.b16 %v2191, %v2191
        %v2224 = vpack.c.b16 %v2192, %v2192
        %v2225 = vpack.c.b16 %v2193, %v2193
        %v2226 = vpack.c.b16 %v2194, %v2194
        %v2227 = vpack.c.b16 %v2195, %v2195
        %v2228 = vpack.c.b16 %v2196, %v2196
        %v2229 = vpack.c.b16 %v2197, %v2197
        %v2230 = vpack.c.b16 %v2198, %v2198
        %v2231 = vpack.c.b16 %v2199, %v2199
        %v2232 = vpack.c.b16 %v2200, %v2200
        %v2233 = vpack.c.b16 %v2201, %v2201
        %v2234 = vpack.c.b16 %v2202, %v2202
        %v2235 = vpack.c.b16 %v2203, %v2203
        %v2236 = vpack.c.b16 %v2204, %v2204
        %v2237 = vpack.c.b16 %v2205, %v2205
        %v2238 = vpack.c.b16 %v2206, %v2206
        %v2239 = vpack.c.b16 %v2207, %v2207
        %v2240 = vpack.c.b16 %v2208, %v2208
        %v2241 = vpack.c.b16 %v2209, %v2209
        %v2242 = vpack.c.b16 %v2210, %v2210
        %v2243 = vunpack.c.l.b16 %v2211
        %v2244 = vunpack.c.l.b16 %v2212
        %v2245 = vunpack.c.l.b16 %v2213
        %v2246 = vunpack.c.l.b16 %v2214
        %v2247 = vunpack.c.l.b16 %v2215
        %v2248 = vunpack.c.l.b16 %v2216
        %v2249 = vunpack.c.l.b16 %v2217
        %v2250 = vunpack.c.l.b16 %v2218
        %v2251 = vunpack.c.l.b16 %v2219
        %v2252 = vunpack.c.l.b16 %v2220
        %v2253 = vunpack.c.l.b16 %v2221
        %v2254 = vunpack.c.l.b16 %v2222
        %v2255 = vunpack.c.l.b16 %v2223
        %v2256 = vunpack.c.l.b16 %v2224
        %v2257 = vunpack.c.l.b16 %v2225
        %v2258 = vunpack.c.l.b16 %v2226
        %v2259 = vunpack.c.l.b16 %v2227
        %v2260 = vunpack.c.l.b16 %v2228
        %v2261 = vunpack.c.l.b16 %v2229
        %v2262 = vunpack.c.l.b16 %v2230
        %v2263 = vunpack.c.l.b16 %v2231
        %v2264 = vunpack.c.l.b16 %v2232
        %v2265 = vunpack.c.l.b16 %v2233
        %v2266 = vunpack.c.l.b16 %v2234
        %v2267 = vunpack.c.l.b16 %v2235
        %v2268 = vunpack.c.l.b16 %v2236
        %v2269 = vunpack.c.l.b16 %v2237
        %v2270 = vunpack.c.l.b16 %v2238
        %v2271 = vunpack.c.l.b16 %v2239
        %v2272 = vunpack.c.l.b16 %v2240
        %v2273 = vunpack.c.l.b16 %v2241
        %v2274 = vunpack.c.l.b16 %v2242
        %vm2275 = vcmask 1041409
        %v2276 = vsel %vm2275, %v2244, %v2243
        %vm2277 = vcmask 1042434
        %v2278 = vsel %vm2277, %v2245, %v2276
        %vm2279 = vcmask 1043459
        %v2280 = vsel %vm2279, %v2246, %v2278
        %vm2281 = vcmask 1044484
        %v2282 = vsel %vm2281, %v2247, %v2280
        %vm2283 = vcmask 1045509
        %v2284 = vsel %vm2283, %v2248, %v2282
        %vm2285 = vcmask 1046534
        %v2286 = vsel %vm2285, %v2249, %v2284
        %vm2287 = vcmask 1047559
        %v2288 = vsel %vm2287, %v2250, %v2286
        %v2289 = vsel %vm2275, %v2252, %v2251
        %v2290 = vsel %vm2277, %v2253, %v2289
        %v2291 = vsel %vm2279, %v2254, %v2290
        %v2292 = vsel %vm2281, %v2255, %v2291
        %v2293 = vsel %vm2283, %v2256, %v2292
        %v2294 = vsel %vm2285, %v2257, %v2293
        %v2295 = vsel %vm2287, %v2258, %v2294
        %v2296 = vsel %vm2275, %v2260, %v2259
        %v2297 = vsel %vm2277, %v2261, %v2296
        %v2298 = vsel %vm2279, %v2262, %v2297
        %v2299 = vsel %vm2281, %v2263, %v2298
        %v2300 = vsel %vm2283, %v2264, %v2299
        %v2301 = vsel %vm2285, %v2265, %v2300
        %v2302 = vsel %vm2287, %v2266, %v2301
        %v2303 = vsel %vm2275, %v2268, %v2267
        %v2304 = vsel %vm2277, %v2269, %v2303
        %v2305 = vsel %vm2279, %v2270, %v2304
        %v2306 = vsel %vm2281, %v2271, %v2305
        %v2307 = vsel %vm2283, %v2272, %v2306
        %v2308 = vsel %vm2285, %v2273, %v2307
        %v2309 = vsel %vm2287, %v2274, %v2308
        %v2310 = vpack.c.b16 %v2288, %v2288
        %v2311 = vpack.c.b16 %v2295, %v2295
        %v2312 = vpack.c.b16 %v2302, %v2302
        %v2313 = vpack.c.b16 %v2309, %v2309
        %2318 = vst [vmem:[%s421] sm:$0xf] %v2310
        %2319 = vst [vmem:[%s421 + $0x4] sm:$0xf] %v2311
        %2320 = vst [vmem:[%s421 + $0x8] sm:$0xf] %v2312
        %2321 = vst [vmem:[%s421 + $0xc] sm:$0xf] %v2313
        %s2322 = sand.u32 %s187, 1
        %s2323 = scalar_lea.sflag [#allocation4], %s2322
        %s2324 = sand.u32 %s187, 1
        %s2325 = smul.addr %s2324, 64
        %s2326 = scalar_lea.vmem [#allocation10], %s2325
        %s2327 = sand.u32 %s215, 1
        %s2328 = scalar_lea.sflag [#allocation12], %s2327
        %s2329 = sand.u32 %s215, 1
        %s2330 = smul.addr %s2329, 16
        %s2331 = scalar_lea.vmem [#allocation11], %s2330
        // Predicated region
        $region57: #{tpu_custom_call.1} parent=39 // pred_check
          %p2332 = pneg %p197
        $region58: #{tpu_custom_call.1} parent=39 // pred_check_branch
          %2334 = sbr.rel (%p2332) target = $region60
        $region59: #{tpu_custom_call.1} parent=39 // pred_region
          %s2336 = ssub.s32 1024, 1024
          %2337 = vsyncadd %s2323, %s2336
          %s2338 = smul.addr %s36, 16
          %s2339 = smul.addr %s35, 32
          %s2340 = sadd.s32 %s2338, %s2339
          %s2341 = smul.addr %s2340, 64
          %s2342 = scalar_lea.hbm %s5, %s2341
          %s2343 = sshll.u32 %s2326, 4
          %s2344 = int_to_ptr.vmem [resolvable:$true] %s2343
          %2349 = dma.vmem_to_hbm [thread:$0]  %s2344, 1024, %s2342, %s2323, 64, 64, 4
        $region60: #{tpu_custom_call.1} parent=39 // pred_fallthru
          _
        // Predicated region
        $region61: #{tpu_custom_call.1} parent=39 // pred_check
          %p2350 = pneg %p225
        $region62: #{tpu_custom_call.1} parent=39 // pred_check_branch
          %2352 = sbr.rel (%p2350) target = $region64
        $region63: #{tpu_custom_call.1} parent=39 // pred_region
          %s2354 = ssub.s32 256, 256
          %2355 = vsyncadd %s2328, %s2354
          %s2356 = smul.addr %s36, 4
          %s2357 = smul.addr %s35, 8
          %s2358 = sadd.s32 %s2356, %s2357
          %s2359 = smul.addr %s2358, 64
          %s2360 = scalar_lea.hbm %s6, %s2359
          %s2361 = sshll.u32 %s2331, 4
          %s2362 = int_to_ptr.vmem [resolvable:$true] %s2361
          %2367 = dma.vmem_to_hbm [thread:$0]  %s2362, 256, %s2360, %s2328, 64, 64, 4
        $region64: #{tpu_custom_call.1} parent=39 // pred_fallthru
          _
      $region40: #{tpu_custom_call.1} parent=5 // pred_fallthru
        _
      %p2368 = scmp.le.s32.totalorder 2, %s26
      // Predicated region
      $region65: #{tpu_custom_call.1} parent=5 // pred_check
        %p2369 = pneg %p2368
      $region66: #{tpu_custom_call.1} parent=5 // pred_check_branch
        %2371 = sbr.rel (%p2369) target = $region68
      $region67: #{tpu_custom_call.1} parent=5 // pred_region
        %s2372 = ssub.s32 %s26, 2
        // Predicated region
        $region69: #{tpu_custom_call.1} parent=67 // pred_check
          %p2373 = pneg %p203
        $region70: #{tpu_custom_call.1} parent=67 // pred_check_branch
          %2375 = sbr.rel (%p2373) target = $region72
        $region71: #{tpu_custom_call.1} parent=67 // pred_region
          %s2376 = sand.u32 %s188, 1
          %s2377 = scalar_lea.sflag [#allocation4], %s2376
          %s2378 = sand.u32 %s188, 1
          %s2379 = smul.addr %s2378, 64
          %s2380 = scalar_lea.vmem [#allocation10], %s2379
          %2381 = dma.done %s2377, 1024
        $region72: #{tpu_custom_call.1} parent=67 // pred_fallthru
          _
        // Predicated region
        $region73: #{tpu_custom_call.1} parent=67 // pred_check
          %p2382 = pneg %p231
        $region74: #{tpu_custom_call.1} parent=67 // pred_check_branch
          %2384 = sbr.rel (%p2382) target = $region76
        $region75: #{tpu_custom_call.1} parent=67 // pred_region
          %s2385 = sand.u32 %s216, 1
          %s2386 = scalar_lea.sflag [#allocation12], %s2385
          %s2387 = sand.u32 %s216, 1
          %s2388 = smul.addr %s2387, 16
          %s2389 = scalar_lea.vmem [#allocation11], %s2388
          %2390 = dma.done %s2386, 256
        $region76: #{tpu_custom_call.1} parent=67 // pred_fallthru
          _
      $region68: #{tpu_custom_call.1} parent=5 // pred_fallthru
        _
    $region6: #{tpu_custom_call.1} parent=1 // loop_footer
      %s30 = sadd.s32 1, %s26
    $region7: #{tpu_custom_call.1} parent=1 // loop_footer_branch
      %25 = sbr.rel target = $region3
    $region8: #{tpu_custom_call.1} parent=1 // loop_exit
      _
    %2391 = vsyncpa [#allocation3], 1
    %s2392 = scalar_lea.sflag [#allocation3], 1
    %2393 = vsyncpa %s2392, 1
    %2394 = vsyncpa [#allocation6], 1
    %s2395 = scalar_lea.sflag [#allocation6], 1
    %2396 = vsyncpa %s2395, 1
    %2397 = vsyncpa [#allocation9], 1
    %2398 = vsyncpa [#allocation4], 1
    %s2399 = scalar_lea.sflag [#allocation4], 1
    %2400 = vsyncpa %s2399, 1
    %2401 = vsyncpa [#allocation12], 1
    %s2402 = scalar_lea.sflag [#allocation12], 1
    %2403 = vsyncpa %s2402, 1

</llo_original>
